<compile_context>
chip_gen: v7x
topology: tpu7x:2x2x1
jax: 0.10.0
libtpu: 0.0.40
codegen_flags: <defaults>
</compile_context>

<pallas_src>
import jax
import jax.numpy as jnp
from jax.experimental import pallas as pl
from jax.experimental.pallas import tpu as pltpu


# --------------------------------------------------------------------------------------
# Kernel
# --------------------------------------------------------------------------------------
def _make_autoencoder_kernel(compute_dtype):
    """Fused encoder+decoder for one batch tile: six (MXU matmul + f32 bias + ReLU)
    stages; all intermediate activations live in VMEM/vregs (no HBM round-trips)."""

    def kernel(x_ref,
               w1_ref, b1_ref, w2_ref, b2_ref, w3_ref, b3_ref,
               w4_ref, b4_ref, w5_ref, b5_ref, w6_ref, b6_ref,
               out_ref):

        def layer(h, w_ref, b_ref, last=False):
            # h is already compute_dtype (bf16 fast path / f32 test path).
            y = jnp.dot(h, w_ref[...], preferred_element_type=jnp.float32)
            y = jnp.maximum(y + b_ref[...], 0.0)       # f32 bias + ReLU on the VPU
            # Fused epilogue: downcast for the next matmul instead of re-casting later.
            return y if last else y.astype(compute_dtype)

        h = x_ref[...]                                  # already compute_dtype
        # Encoder: input -> 512 -> 128 -> latent (latent zero-padded to 128 lanes)
        h = layer(h, w1_ref, b1_ref)
        h = layer(h, w2_ref, b2_ref)
        h = layer(h, w3_ref, b3_ref)
        # Decoder: latent -> 128 -> 512 -> input
        h = layer(h, w4_ref, b4_ref)
        h = layer(h, w5_ref, b5_ref)
        h = layer(h, w6_ref, b6_ref, last=True)
        out_ref[...] = h.astype(out_ref.dtype)

    return kernel


# --------------------------------------------------------------------------------------
# One-time parameter preprocessing (hoisted out of the per-call forward)
# --------------------------------------------------------------------------------------
def prepare_autoencoder_params(params, input_shape, compute_dtype=jnp.bfloat16):
    """Pad the latent bottleneck and input_shape to 128 lanes (numerically exact zero
    padding), cast weights to compute_dtype, reshape biases to (1, out) f32.
    params: list of 6 (W, b) with W shaped (in_features, out_features).
    Returns (prepared_params, d_in_padded)."""
    params = [(jnp.asarray(w), jnp.asarray(b)) for w, b in params]

    # Latent bottleneck -> 128 lanes (padded W3 cols / b3 entries / W4 rows are zeros).
    w3, b3 = params[2]
    w4, b4 = params[3]
    lat_pad = (-w3.shape[1]) % 128
    if lat_pad:
        params[2] = (jnp.pad(w3, ((0, 0), (0, lat_pad))), jnp.pad(b3, ((0, lat_pad),)))
        params[3] = (jnp.pad(w4, ((0, lat_pad), (0, 0))), b4)

    # input_shape -> multiple of 128 (lane-dense x/out blocks, unmasked stores).
    d_in_p = ((input_shape + 127) // 128) * 128
    in_pad = d_in_p - input_shape
    if in_pad:
        w1, b1 = params[0]
        w6, b6 = params[5]
        params[0] = (jnp.pad(w1, ((0, in_pad), (0, 0))), b1)
        params[5] = (jnp.pad(w6, ((0, 0), (0, in_pad))), jnp.pad(b6, ((0, in_pad),)))

    prepared = []
    for w, b in params:
        prepared.append((jnp.asarray(w, compute_dtype),
                         jnp.asarray(b, jnp.float32).reshape(1, -1)))
    return prepared, d_in_p


# --------------------------------------------------------------------------------------
# Forward
# --------------------------------------------------------------------------------------
def _choose_tm(batch, tm_max):
    """Batch tile rows: multiple of 8 (sublane-legal for any tm_max), rounded to 256 for
    full MXU passes on v6e/v7x, and small enough that the grid has >=2 steps for v7x
    megacore whenever the batch allows it."""
    bp8 = ((batch + 7) // 8) * 8
    tm = min(int(tm_max), bp8)
    tm = max(8, (tm // 8) * 8)
    if tm >= 256:
        tm = (tm // 256) * 256
    # If a single step would cover the whole (large) batch, split into >=2 steps.
    if -(-bp8 // tm) < 2 and bp8 >= 512:
        tm = max(256, ((bp8 // 2) // 256) * 256)
    return tm


def autoencoder_forward(x, prepared_params, d_in_p, *,
                        compute_dtype=jnp.bfloat16, tm_max=1024):
    """x: (batch, input_shape) float32. prepared_params/d_in_p from
    prepare_autoencoder_params (must have been prepared with the same compute_dtype).
    bf16 compute_dtype is the production default on all TPU generations; float32 is a
    test-only path."""
    batch, input_shape = x.shape
    in_pad = d_in_p - input_shape

    tm = _choose_tm(batch, tm_max)
    batch_p = ((batch + tm - 1) // tm) * tm

    # Feed activations to the kernel in compute_dtype (halves the input DMA on bf16).
    x_p = x.astype(compute_dtype)
    if batch_p != batch or in_pad:
        x_p = jnp.pad(x_p, ((0, batch_p - batch), (0, in_pad)))

    flat_args = [x_p]
    in_specs = [pl.BlockSpec((tm, d_in_p), lambda i: (i, 0))]
    flops = 0
    param_bytes = 0
    for w, b in prepared_params:
        flat_args += [w, b]
        # Constant index_map -> same block every step: VMEM-resident, no per-step DMA.
        in_specs += [pl.BlockSpec(w.shape, lambda i: (0, 0)),
                     pl.BlockSpec(b.shape, lambda i: (0, 0))]
        flops += 2 * batch_p * w.shape[0] * w.shape[1]
        param_bytes += w.size * w.dtype.itemsize + b.size * b.dtype.itemsize

    cost = pl.CostEstimate(
        flops=int(flops),
        transcendentals=0,
        bytes_accessed=int(x_p.size * x_p.dtype.itemsize            # input (compute dtype)
                           + batch_p * d_in_p * 4                   # f32 output
                           + param_bytes))                          # weights read once

    # VMEM budget: double-buffered x/out tiles + resident params + activation headroom.
    vmem_need = (2 * tm * d_in_p * x_p.dtype.itemsize
                 + 2 * tm * d_in_p * 4
                 + 2 * param_bytes
                 + 4 * tm * 512 * 4)
    vmem_limit = int(min(max(2 * vmem_need, 32 * 1024 * 1024), 64 * 1024 * 1024))

    out_p = pl.pallas_call(
        _make_autoencoder_kernel(compute_dtype),
        out_shape=jax.ShapeDtypeStruct((batch_p, d_in_p), jnp.float32),
        grid=(batch_p // tm,),
        in_specs=in_specs,
        out_specs=pl.BlockSpec((tm, d_in_p), lambda i: (i, 0)),
        compiler_params=pltpu.CompilerParams(
            dimension_semantics=("parallel",),        # megacore sharding on v7x
            vmem_limit_bytes=vmem_limit),
        cost_estimate=cost,
    )(*flat_args)

    return out_p[:batch, :input_shape]


# --------------------------------------------------------------------------------------
# Init + reference
# --------------------------------------------------------------------------------------
def init_autoencoder_params(key, input_shape, latent_dim=16):
    """Deterministic PyTorch-Linear-style init (uniform +-1/sqrt(fan_in)).
    Returns a list of (W, b) with W of shape (in_features, out_features)."""
    dims = [(input_shape, 512), (512, 128), (128, latent_dim),
            (latent_dim, 128), (128, 512), (512, input_shape)]
    params = []
    for fan_in, fan_out in dims:
        key, kw, kb = jax.random.split(key, 3)
        bound = 1.0 / (fan_in ** 0.5)
        w = jax.random.uniform(kw, (fan_in, fan_out), jnp.float32, -bound, bound)
        b = jax.random.uniform(kb, (fan_out,), jnp.float32, -bound, bound)
        params.append((w, b))
    return params


def reference_forward(x, params, compute_dtype=jnp.float32):
    """Plain-JAX reference mirroring the kernel's matmul/activation dtype policy."""
    h = x.astype(compute_dtype)
    for w, b in params:
        y = jnp.dot(h.astype(compute_dtype), w.astype(compute_dtype),
                    preferred_element_type=jnp.float32) + b
        h = jnp.maximum(y, 0.0)
    return h


# --------------------------------------------------------------------------------------
# Demo / checks
# --------------------------------------------------------------------------------------
if __name__ == "__main__":
    INPUT_SHAPE = 256
    LATENT_DIM = 16
    BATCH = 8

    key = jax.random.PRNGKey(0)
    key, kx = jax.random.split(key)
    x = jax.random.normal(kx, (BATCH, INPUT_SHAPE), jnp.float32)
    params = init_autoencoder_params(key, INPUT_SHAPE, LATENT_DIM)

    # f32 compute path (test path): tight check against the plain-JAX reference.
    prep_f32, din_f32 = prepare_autoencoder_params(params, INPUT_SHAPE, jnp.float32)
    y_f32 = jax.block_until_ready(
        autoencoder_forward(x, prep_f32, din_f32, compute_dtype=jnp.float32))
    ref_f32 = reference_forward(x, params, jnp.float32)
    assert y_f32.shape == (BATCH, INPUT_SHAPE)
    assert jnp.allclose(y_f32, ref_f32, atol=1e-4, rtol=1e-4), "f32 mismatch vs ref"

    # bf16 fast path (production default): compare against a reference applying the same
    # bf16-input / f32-accumulate policy.
    prep_bf16, din_bf16 = prepare_autoencoder_params(params, INPUT_SHAPE, jnp.bfloat16)
    y_bf16 = jax.block_until_ready(
        autoencoder_forward(x, prep_bf16, din_bf16, compute_dtype=jnp.bfloat16))
    ref_bf16 = reference_forward(x, params, jnp.bfloat16)
    assert y_bf16.shape == (BATCH, INPUT_SHAPE)
    assert jnp.allclose(y_bf16, ref_bf16, atol=1e-2, rtol=1e-2), "bf16 mismatch vs ref"

    # Multi-tile grid + ragged batch: exercises batch padding and the pipelined path.
    key, kx2 = jax.random.split(key)
    x2 = jax.random.normal(kx2, (40, INPUT_SHAPE), jnp.float32)
    y2 = jax.block_until_ready(
        autoencoder_forward(x2, prep_f32, din_f32, compute_dtype=jnp.float32, tm_max=16))
    ref2 = reference_forward(x2, params, jnp.float32)
    assert y2.shape == (40, INPUT_SHAPE)
    assert jnp.allclose(y2, ref2, atol=1e-4, rtol=1e-4), "tiled-grid mismatch vs ref"

    # Non-128-aligned input_shape: exercises the lane-padding path (x / W1 / W6 / b6).
    INPUT_SHAPE3 = 72
    key, kp3, kx3 = jax.random.split(key, 3)
    params3 = init_autoencoder_params(kp3, INPUT_SHAPE3, LATENT_DIM)
    x3 = jax.random.normal(kx3, (24, INPUT_SHAPE3), jnp.float32)
    prep3, din3 = prepare_autoencoder_params(params3, INPUT_SHAPE3, jnp.float32)
    y3 = jax.block_until_ready(
        autoencoder_forward(x3, prep3, din3, compute_dtype=jnp.float32, tm_max=16))
    ref3 = reference_forward(x3, params3, jnp.float32)
    assert y3.shape == (24, INPUT_SHAPE3)
    assert jnp.allclose(y3, ref3, atol=1e-4, rtol=1e-4), "lane-padded mismatch vs ref"

    print("KERNEL_OK")
</pallas_src>

<mosaic_0001>
module attributes {stable_mosaic.version = 11 : i64} {
  func.func @kernel(%arg0: i32, %arg1: memref<8x256xf32, #tpu.memory_space<vmem>>, %arg2: memref<256x512xf32, #tpu.memory_space<vmem>>, %arg3: memref<1x512xf32, #tpu.memory_space<vmem>>, %arg4: memref<512x128xf32, #tpu.memory_space<vmem>>, %arg5: memref<1x128xf32, #tpu.memory_space<vmem>>, %arg6: memref<128x128xf32, #tpu.memory_space<vmem>>, %arg7: memref<1x128xf32, #tpu.memory_space<vmem>>, %arg8: memref<128x128xf32, #tpu.memory_space<vmem>>, %arg9: memref<1x128xf32, #tpu.memory_space<vmem>>, %arg10: memref<128x512xf32, #tpu.memory_space<vmem>>, %arg11: memref<1x512xf32, #tpu.memory_space<vmem>>, %arg12: memref<512x256xf32, #tpu.memory_space<vmem>>, %arg13: memref<1x256xf32, #tpu.memory_space<vmem>>, %arg14: memref<8x256xf32, #tpu.memory_space<vmem>>) attributes {dimension_semantics = [#tpu.dimension_semantics<parallel>], iteration_bounds = array<i64: 1>, scalar_prefetch = 0 : i64, scratch_operands = 0 : i64, tpu.core_type = #tpu.core_type<tc>, window_params = [{transform_indices = @transform_0, window_bounds = array<i64: 8, 256>}, {pipeline_mode = #tpu.pipeline_mode<synchronous>, transform_indices = @transform_1, window_bounds = array<i64: 256, 512>}, {pipeline_mode = #tpu.pipeline_mode<synchronous>, transform_indices = @transform_2, window_bounds = array<i64: 1, 512>}, {pipeline_mode = #tpu.pipeline_mode<synchronous>, transform_indices = @transform_3, window_bounds = array<i64: 512, 128>}, {pipeline_mode = #tpu.pipeline_mode<synchronous>, transform_indices = @transform_4, window_bounds = array<i64: 1, 128>}, {pipeline_mode = #tpu.pipeline_mode<synchronous>, transform_indices = @transform_5, window_bounds = array<i64: 128, 128>}, {pipeline_mode = #tpu.pipeline_mode<synchronous>, transform_indices = @transform_6, window_bounds = array<i64: 1, 128>}, {pipeline_mode = #tpu.pipeline_mode<synchronous>, transform_indices = @transform_7, window_bounds = array<i64: 128, 128>}, {pipeline_mode = #tpu.pipeline_mode<synchronous>, transform_indices = @transform_8, window_bounds = array<i64: 1, 128>}, {pipeline_mode = #tpu.pipeline_mode<synchronous>, transform_indices = @transform_9, window_bounds = array<i64: 128, 512>}, {pipeline_mode = #tpu.pipeline_mode<synchronous>, transform_indices = @transform_10, window_bounds = array<i64: 1, 512>}, {pipeline_mode = #tpu.pipeline_mode<synchronous>, transform_indices = @transform_11, window_bounds = array<i64: 512, 256>}, {pipeline_mode = #tpu.pipeline_mode<synchronous>, transform_indices = @transform_12, window_bounds = array<i64: 1, 256>}, {transform_indices = @transform_13, window_bounds = array<i64: 8, 256>}]} {
    %c0 = arith.constant 0 : index
    %c0_0 = arith.constant 0 : index
    %0 = vector.load %arg1[%c0, %c0_0] : memref<8x256xf32, #tpu.memory_space<vmem>>, vector<8x256xf32>
    %c0_1 = arith.constant 0 : index
    %c0_2 = arith.constant 0 : index
    %1 = vector.load %arg2[%c0_1, %c0_2] : memref<256x512xf32, #tpu.memory_space<vmem>>, vector<256x512xf32>
    %cst = arith.constant dense<0.000000e+00> : vector<8x512xf32>
    %2 = tpu.matmul %0, %1, %cst {dimension_numbers = #tpu.dot_dimension_numbers<[1], [0], [0], [1], [0, 0, 1, 1], [], []>} : vector<8x256xf32>, vector<256x512xf32>, vector<8x512xf32> -> vector<8x512xf32>
    %c0_3 = arith.constant 0 : index
    %c0_4 = arith.constant 0 : index
    %3 = vector.load %arg3[%c0_3, %c0_4] : memref<1x512xf32, #tpu.memory_space<vmem>>, vector<1x512xf32>
    %4 = vector.broadcast %3 : vector<1x512xf32> to vector<8x512xf32>
    %5 = arith.addf %2, %4 : vector<8x512xf32>
    %cst_5 = arith.constant 0.000000e+00 : f32
    %6 = vector.broadcast %cst_5 : f32 to vector<8x512xf32>
    %7 = arith.maximumf %5, %6 : vector<8x512xf32>
    %c0_6 = arith.constant 0 : index
    %c0_7 = arith.constant 0 : index
    %8 = vector.load %arg4[%c0_6, %c0_7] : memref<512x128xf32, #tpu.memory_space<vmem>>, vector<512x128xf32>
    %cst_8 = arith.constant dense<0.000000e+00> : vector<8x128xf32>
    %9 = tpu.matmul %7, %8, %cst_8 {dimension_numbers = #tpu.dot_dimension_numbers<[1], [0], [0], [1], [0, 0, 1, 1], [], []>} : vector<8x512xf32>, vector<512x128xf32>, vector<8x128xf32> -> vector<8x128xf32>
    %c0_9 = arith.constant 0 : index
    %c0_10 = arith.constant 0 : index
    %10 = vector.load %arg5[%c0_9, %c0_10] : memref<1x128xf32, #tpu.memory_space<vmem>>, vector<1x128xf32>
    %11 = vector.broadcast %10 : vector<1x128xf32> to vector<8x128xf32>
    %12 = arith.addf %9, %11 : vector<8x128xf32>
    %cst_11 = arith.constant 0.000000e+00 : f32
    %13 = vector.broadcast %cst_11 : f32 to vector<8x128xf32>
    %14 = arith.maximumf %12, %13 : vector<8x128xf32>
    %c0_12 = arith.constant 0 : index
    %c0_13 = arith.constant 0 : index
    %15 = vector.load %arg6[%c0_12, %c0_13] : memref<128x128xf32, #tpu.memory_space<vmem>>, vector<128x128xf32>
    %cst_14 = arith.constant dense<0.000000e+00> : vector<8x128xf32>
    %16 = tpu.matmul %14, %15, %cst_14 {dimension_numbers = #tpu.dot_dimension_numbers<[1], [0], [0], [1], [0, 0, 1, 1], [], []>} : vector<8x128xf32>, vector<128x128xf32>, vector<8x128xf32> -> vector<8x128xf32>
    %c0_15 = arith.constant 0 : index
    %c0_16 = arith.constant 0 : index
    %17 = vector.load %arg7[%c0_15, %c0_16] : memref<1x128xf32, #tpu.memory_space<vmem>>, vector<1x128xf32>
    %18 = vector.broadcast %17 : vector<1x128xf32> to vector<8x128xf32>
    %19 = arith.addf %16, %18 : vector<8x128xf32>
    %cst_17 = arith.constant 0.000000e+00 : f32
    %20 = vector.broadcast %cst_17 : f32 to vector<8x128xf32>
    %21 = arith.maximumf %19, %20 : vector<8x128xf32>
    %c0_18 = arith.constant 0 : index
    %c0_19 = arith.constant 0 : index
    %22 = vector.load %arg8[%c0_18, %c0_19] : memref<128x128xf32, #tpu.memory_space<vmem>>, vector<128x128xf32>
    %cst_20 = arith.constant dense<0.000000e+00> : vector<8x128xf32>
    %23 = tpu.matmul %21, %22, %cst_20 {dimension_numbers = #tpu.dot_dimension_numbers<[1], [0], [0], [1], [0, 0, 1, 1], [], []>} : vector<8x128xf32>, vector<128x128xf32>, vector<8x128xf32> -> vector<8x128xf32>
    %c0_21 = arith.constant 0 : index
    %c0_22 = arith.constant 0 : index
    %24 = vector.load %arg9[%c0_21, %c0_22] : memref<1x128xf32, #tpu.memory_space<vmem>>, vector<1x128xf32>
    %25 = vector.broadcast %24 : vector<1x128xf32> to vector<8x128xf32>
    %26 = arith.addf %23, %25 : vector<8x128xf32>
    %cst_23 = arith.constant 0.000000e+00 : f32
    %27 = vector.broadcast %cst_23 : f32 to vector<8x128xf32>
    %28 = arith.maximumf %26, %27 : vector<8x128xf32>
    %c0_24 = arith.constant 0 : index
    %c0_25 = arith.constant 0 : index
    %29 = vector.load %arg10[%c0_24, %c0_25] : memref<128x512xf32, #tpu.memory_space<vmem>>, vector<128x512xf32>
    %cst_26 = arith.constant dense<0.000000e+00> : vector<8x512xf32>
    %30 = tpu.matmul %28, %29, %cst_26 {dimension_numbers = #tpu.dot_dimension_numbers<[1], [0], [0], [1], [0, 0, 1, 1], [], []>} : vector<8x128xf32>, vector<128x512xf32>, vector<8x512xf32> -> vector<8x512xf32>
    %c0_27 = arith.constant 0 : index
    %c0_28 = arith.constant 0 : index
    %31 = vector.load %arg11[%c0_27, %c0_28] : memref<1x512xf32, #tpu.memory_space<vmem>>, vector<1x512xf32>
    %32 = vector.broadcast %31 : vector<1x512xf32> to vector<8x512xf32>
    %33 = arith.addf %30, %32 : vector<8x512xf32>
    %cst_29 = arith.constant 0.000000e+00 : f32
    %34 = vector.broadcast %cst_29 : f32 to vector<8x512xf32>
    %35 = arith.maximumf %33, %34 : vector<8x512xf32>
    %c0_30 = arith.constant 0 : index
    %c0_31 = arith.constant 0 : index
    %36 = vector.load %arg12[%c0_30, %c0_31] : memref<512x256xf32, #tpu.memory_space<vmem>>, vector<512x256xf32>
    %cst_32 = arith.constant dense<0.000000e+00> : vector<8x256xf32>
    %37 = tpu.matmul %35, %36, %cst_32 {dimension_numbers = #tpu.dot_dimension_numbers<[1], [0], [0], [1], [0, 0, 1, 1], [], []>} : vector<8x512xf32>, vector<512x256xf32>, vector<8x256xf32> -> vector<8x256xf32>
    %c0_33 = arith.constant 0 : index
    %c0_34 = arith.constant 0 : index
    %38 = vector.load %arg13[%c0_33, %c0_34] : memref<1x256xf32, #tpu.memory_space<vmem>>, vector<1x256xf32>
    %39 = vector.broadcast %38 : vector<1x256xf32> to vector<8x256xf32>
    %40 = arith.addf %37, %39 : vector<8x256xf32>
    %cst_35 = arith.constant 0.000000e+00 : f32
    %41 = vector.broadcast %cst_35 : f32 to vector<8x256xf32>
    %42 = arith.maximumf %40, %41 : vector<8x256xf32>
    %c0_36 = arith.constant 0 : index
    %c0_37 = arith.constant 0 : index
    %43 = vector.load %arg14[%c0_36, %c0_37] : memref<8x256xf32, #tpu.memory_space<vmem>>, vector<8x256xf32>
    tpu.vector_store %arg14[%c0_36, %c0_37], %42 {strides = array<i32>} : memref<8x256xf32, #tpu.memory_space<vmem>>, vector<8x256xf32>,
    return
  }
  func.func @transform_0(%arg0: i32) -> (i32, i32) {
    %c0_i32 = arith.constant 0 : i32
    %c0_i32_0 = arith.constant 0 : i32
    return %arg0, %c0_i32 : i32, i32
  }
  func.func @transform_1(%arg0: i32) -> (i32, i32) {
    %c0_i32 = arith.constant 0 : i32
    %c0_i32_0 = arith.constant 0 : i32
    %c0_i32_1 = arith.constant 0 : i32
    return %c0_i32, %c0_i32_0 : i32, i32
  }
  func.func @transform_2(%arg0: i32) -> (i32, i32) {
    %c0_i32 = arith.constant 0 : i32
    %c0_i32_0 = arith.constant 0 : i32
    %c0_i32_1 = arith.constant 0 : i32
    return %c0_i32, %c0_i32_0 : i32, i32
  }
  func.func @transform_3(%arg0: i32) -> (i32, i32) {
    %c0_i32 = arith.constant 0 : i32
    %c0_i32_0 = arith.constant 0 : i32
    %c0_i32_1 = arith.constant 0 : i32
    return %c0_i32, %c0_i32_0 : i32, i32
  }
  func.func @transform_4(%arg0: i32) -> (i32, i32) {
    %c0_i32 = arith.constant 0 : i32
    %c0_i32_0 = arith.constant 0 : i32
    %c0_i32_1 = arith.constant 0 : i32
    return %c0_i32, %c0_i32_0 : i32, i32
  }
  func.func @transform_5(%arg0: i32) -> (i32, i32) {
    %c0_i32 = arith.constant 0 : i32
    %c0_i32_0 = arith.constant 0 : i32
    %c0_i32_1 = arith.constant 0 : i32
    return %c0_i32, %c0_i32_0 : i32, i32
  }
  func.func @transform_6(%arg0: i32) -> (i32, i32) {
    %c0_i32 = arith.constant 0 : i32
    %c0_i32_0 = arith.constant 0 : i32
    %c0_i32_1 = arith.constant 0 : i32
    return %c0_i32, %c0_i32_0 : i32, i32
  }
  func.func @transform_7(%arg0: i32) -> (i32, i32) {
    %c0_i32 = arith.constant 0 : i32
    %c0_i32_0 = arith.constant 0 : i32
    %c0_i32_1 = arith.constant 0 : i32
    return %c0_i32, %c0_i32_0 : i32, i32
  }
  func.func @transform_8(%arg0: i32) -> (i32, i32) {
    %c0_i32 = arith.constant 0 : i32
    %c0_i32_0 = arith.constant 0 : i32
    %c0_i32_1 = arith.constant 0 : i32
    return %c0_i32, %c0_i32_0 : i32, i32
  }
  func.func @transform_9(%arg0: i32) -> (i32, i32) {
    %c0_i32 = arith.constant 0 : i32
    %c0_i32_0 = arith.constant 0 : i32
    %c0_i32_1 = arith.constant 0 : i32
    return %c0_i32, %c0_i32_0 : i32, i32
  }
  func.func @transform_10(%arg0: i32) -> (i32, i32) {
    %c0_i32 = arith.constant 0 : i32
    %c0_i32_0 = arith.constant 0 : i32
    %c0_i32_1 = arith.constant 0 : i32
    return %c0_i32, %c0_i32_0 : i32, i32
  }
  func.func @transform_11(%arg0: i32) -> (i32, i32) {
    %c0_i32 = arith.constant 0 : i32
    %c0_i32_0 = arith.constant 0 : i32
    %c0_i32_1 = arith.constant 0 : i32
    return %c0_i32, %c0_i32_0 : i32, i32
  }
  func.func @transform_12(%arg0: i32) -> (i32, i32) {
    %c0_i32 = arith.constant 0 : i32
    %c0_i32_0 = arith.constant 0 : i32
    %c0_i32_1 = arith.constant 0 : i32
    return %c0_i32, %c0_i32_0 : i32, i32
  }
  func.func @transform_13(%arg0: i32) -> (i32, i32) {
    %c0_i32 = arith.constant 0 : i32
    %c0_i32_0 = arith.constant 0 : i32
    return %arg0, %c0_i32 : i32, i32
  }
}

</mosaic_0001>

<llo_original>
// kernel: tpu_custom_call.1
$region0: #{tpu_custom_call.1}
  #allocation0 [shape = 'u32[]', space=smem, size = 0x4, offset = 0x4, fixed_abs, tag = 'smem constant byte address 0x4 - core index']
  #allocation1 [shape = 'u32[144,128]{1,0:T(1,128)}', space=vmem, size = 0x12000, scoped, tag = 'internal scratch']
  %s0 = inlined_call_operand.hbm [shape: f32[8,256], index: 0, kind: input, shape index: {}]
  %s1 = inlined_call_operand.hbm [shape: f32[256,512], index: 1, kind: input, shape index: {}]
  %s2 = inlined_call_operand.vmem [shape: f32[1,512], index: 2, kind: input, shape index: {}]
  %s3 = inlined_call_operand.hbm [shape: f32[512,128], index: 3, kind: input, shape index: {}]
  %s4 = inlined_call_operand.vmem [shape: f32[1,128], index: 4, kind: input, shape index: {}]
  %s5 = inlined_call_operand.hbm [shape: f32[128,128], index: 5, kind: input, shape index: {}]
  %s6 = inlined_call_operand.vmem [shape: f32[1,128], index: 6, kind: input, shape index: {}]
  %s7 = inlined_call_operand.hbm [shape: f32[128,128], index: 7, kind: input, shape index: {}]
  %s8 = inlined_call_operand.vmem [shape: f32[1,128], index: 8, kind: input, shape index: {}]
  %s9 = inlined_call_operand.hbm [shape: f32[128,512], index: 9, kind: input, shape index: {}]
  %s10 = inlined_call_operand.vmem [shape: f32[1,512], index: 10, kind: input, shape index: {}]
  %s11 = inlined_call_operand.hbm [shape: f32[512,256], index: 11, kind: input, shape index: {}]
  %s12 = inlined_call_operand.vmem [shape: f32[1,256], index: 12, kind: input, shape index: {}]
  %s13 = inlined_call_operand.hbm [shape: f32[8,256], index: 13, kind: output, shape index: {}]
  %s14 = sld [smem:[#allocation0]]
  $region90: #{tpu_custom_call.1} parent=0
    _
  %s16 = ssub.s32 1, %s14
  %s17 = scalar_select 0, %s16, %s14
  $region1: #{tpu_custom_call.1} parent=0
    #allocation2 [shape = 'u8[8192]{0}', space=vmem, size = 0x2000, scoped, tag = 'input window, operand 0, single buffered']
    #allocation3 [shape = 's32[1]{0}', space=sflag, size = 0x4, scoped, tag = 'scoped memory for tpu_custom_call.1']
    #allocation4 [shape = 's32[1]{0}', space=sflag, size = 0x4, scoped, tag = 'scoped memory for tpu_custom_call.1']
    #allocation5 [shape = 'u8[524288]{0}', space=vmem, size = 0x80000, scoped, tag = 'input window, operand 1, single buffered']
    #allocation6 [shape = 's32[1]{0}', space=sflag, size = 0x4, scoped, tag = 'scoped memory for tpu_custom_call.1']
    #allocation7 [shape = 'u8[262144]{0}', space=vmem, size = 0x40000, scoped, tag = 'input window, operand 3, single buffered']
    #allocation8 [shape = 'u8[65536]{0}', space=vmem, size = 0x10000, scoped, tag = 'input window, operand 5, single buffered']
    #allocation9 [shape = 's32[1]{0}', space=sflag, size = 0x4, scoped, tag = 'scoped memory for tpu_custom_call.1']
    #allocation10 [shape = 'u8[65536]{0}', space=vmem, size = 0x10000, scoped, tag = 'input window, operand 7, single buffered']
    #allocation11 [shape = 'u8[262144]{0}', space=vmem, size = 0x40000, scoped, tag = 'input window, operand 9, single buffered']
    #allocation12 [shape = 's32[1]{0}', space=sflag, size = 0x4, scoped, tag = 'scoped memory for tpu_custom_call.1']
    #allocation13 [shape = 'u8[524288]{0}', space=vmem, size = 0x80000, scoped, tag = 'input window, operand 11, single buffered']
    #allocation14 [shape = 'u8[8192]{0}', space=vmem, size = 0x2000, scoped, tag = 'output window, operand 0, single buffered']
    %18 = vsyncpa [#allocation3], 0
    %19 = vsyncpa [#allocation6], 0
    %20 = vsyncpa [#allocation9], 0
    %21 = vsyncpa [#allocation12], 0
    %22 = vsyncpa [#allocation4], 0
    // Predicated region
    $region2: #{tpu_custom_call.1} parent=1 // pred_check
      _
    $region3: #{tpu_custom_call.1} parent=1 // pred_check_branch
      %24 = sbr.rel (0) target = $region5
    $region4: #{tpu_custom_call.1} parent=1 // pred_region
      %s26 = ssub.s32 256, 256
      %27 = vsyncadd [#allocation3], %s26
      %s29 = sshll.u32 [#allocation2], 4
      %s30 = int_to_ptr.vmem [resolvable:$true] %s29
      %32 = dma.hbm_to_vmem [thread:$0]  %s0, 256, %s30, [#allocation3]
    $region5: #{tpu_custom_call.1} parent=1 // pred_fallthru
      _
    // Predicated region
    $region6: #{tpu_custom_call.1} parent=1 // pred_check
      _
    $region7: #{tpu_custom_call.1} parent=1 // pred_check_branch
      %34 = sbr.rel (0) target = $region9
    $region8: #{tpu_custom_call.1} parent=1 // pred_region
      %s36 = ssub.s32 16384, 16384
      %37 = vsyncadd [#allocation6], %s36
      %s38 = sshll.u32 [#allocation5], 4
      %s39 = int_to_ptr.vmem [resolvable:$true] %s38
      %44 = dma.hbm_to_vmem [thread:$0]  %s1, 16384, %s39, [#allocation6], 512, 512, 32
    $region9: #{tpu_custom_call.1} parent=1 // pred_fallthru
      _
    // Predicated region
    $region10: #{tpu_custom_call.1} parent=1 // pred_check
      _
    $region11: #{tpu_custom_call.1} parent=1 // pred_check_branch
      %46 = sbr.rel (0) target = $region13
    $region12: #{tpu_custom_call.1} parent=1 // pred_region
      _
    $region13: #{tpu_custom_call.1} parent=1 // pred_fallthru
      _
    // Predicated region
    $region14: #{tpu_custom_call.1} parent=1 // pred_check
      _
    $region15: #{tpu_custom_call.1} parent=1 // pred_check_branch
      %48 = sbr.rel (0) target = $region17
    $region16: #{tpu_custom_call.1} parent=1 // pred_region
      %s50 = ssub.s32 8192, 8192
      %51 = vsyncadd [#allocation6], %s50
      %s52 = sshll.u32 [#allocation7], 4
      %s53 = int_to_ptr.vmem [resolvable:$true] %s52
      %58 = dma.hbm_to_vmem [thread:$0]  %s3, 8192, %s53, [#allocation6], 128, 128, 8
    $region17: #{tpu_custom_call.1} parent=1 // pred_fallthru
      _
    // Predicated region
    $region18: #{tpu_custom_call.1} parent=1 // pred_check
      _
    $region19: #{tpu_custom_call.1} parent=1 // pred_check_branch
      %60 = sbr.rel (0) target = $region21
    $region20: #{tpu_custom_call.1} parent=1 // pred_region
      _
    $region21: #{tpu_custom_call.1} parent=1 // pred_fallthru
      _
    // Predicated region
    $region22: #{tpu_custom_call.1} parent=1 // pred_check
      _
    $region23: #{tpu_custom_call.1} parent=1 // pred_check_branch
      %62 = sbr.rel (0) target = $region25
    $region24: #{tpu_custom_call.1} parent=1 // pred_region
      %s64 = ssub.s32 2048, 2048
      %65 = vsyncadd [#allocation9], %s64
      %s66 = sshll.u32 [#allocation8], 4
      %s67 = int_to_ptr.vmem [resolvable:$true] %s66
      %72 = dma.hbm_to_vmem [thread:$0]  %s5, 2048, %s67, [#allocation9], 128, 128, 8
    $region25: #{tpu_custom_call.1} parent=1 // pred_fallthru
      _
    // Predicated region
    $region26: #{tpu_custom_call.1} parent=1 // pred_check
      _
    $region27: #{tpu_custom_call.1} parent=1 // pred_check_branch
      %74 = sbr.rel (0) target = $region29
    $region28: #{tpu_custom_call.1} parent=1 // pred_region
      _
    $region29: #{tpu_custom_call.1} parent=1 // pred_fallthru
      _
    // Predicated region
    $region30: #{tpu_custom_call.1} parent=1 // pred_check
      _
    $region31: #{tpu_custom_call.1} parent=1 // pred_check_branch
      %76 = sbr.rel (0) target = $region33
    $region32: #{tpu_custom_call.1} parent=1 // pred_region
      %s78 = ssub.s32 2048, 2048
      %79 = vsyncadd [#allocation9], %s78
      %s80 = sshll.u32 [#allocation10], 4
      %s81 = int_to_ptr.vmem [resolvable:$true] %s80
      %86 = dma.hbm_to_vmem [thread:$0]  %s7, 2048, %s81, [#allocation9], 128, 128, 8
    $region33: #{tpu_custom_call.1} parent=1 // pred_fallthru
      _
    // Predicated region
    $region34: #{tpu_custom_call.1} parent=1 // pred_check
      _
    $region35: #{tpu_custom_call.1} parent=1 // pred_check_branch
      %88 = sbr.rel (0) target = $region37
    $region36: #{tpu_custom_call.1} parent=1 // pred_region
      _
    $region37: #{tpu_custom_call.1} parent=1 // pred_fallthru
      _
    // Predicated region
    $region38: #{tpu_custom_call.1} parent=1 // pred_check
      _
    $region39: #{tpu_custom_call.1} parent=1 // pred_check_branch
      %90 = sbr.rel (0) target = $region41
    $region40: #{tpu_custom_call.1} parent=1 // pred_region
      %s92 = ssub.s32 8192, 8192
      %93 = vsyncadd [#allocation12], %s92
      %s94 = sshll.u32 [#allocation11], 4
      %s95 = int_to_ptr.vmem [resolvable:$true] %s94
      %100 = dma.hbm_to_vmem [thread:$0]  %s9, 8192, %s95, [#allocation12], 512, 512, 32
    $region41: #{tpu_custom_call.1} parent=1 // pred_fallthru
      _
    // Predicated region
    $region42: #{tpu_custom_call.1} parent=1 // pred_check
      _
    $region43: #{tpu_custom_call.1} parent=1 // pred_check_branch
      %102 = sbr.rel (0) target = $region45
    $region44: #{tpu_custom_call.1} parent=1 // pred_region
      _
    $region45: #{tpu_custom_call.1} parent=1 // pred_fallthru
      _
    // Predicated region
    $region46: #{tpu_custom_call.1} parent=1 // pred_check
      _
    $region47: #{tpu_custom_call.1} parent=1 // pred_check_branch
      %104 = sbr.rel (0) target = $region49
    $region48: #{tpu_custom_call.1} parent=1 // pred_region
      %s106 = ssub.s32 16384, 16384
      %107 = vsyncadd [#allocation12], %s106
      %s108 = sshll.u32 [#allocation13], 4
      %s109 = int_to_ptr.vmem [resolvable:$true] %s108
      %114 = dma.hbm_to_vmem [thread:$0]  %s11, 16384, %s109, [#allocation12], 256, 256, 16
    $region49: #{tpu_custom_call.1} parent=1 // pred_fallthru
      _
    // Predicated region
    $region50: #{tpu_custom_call.1} parent=1 // pred_check
      _
    $region51: #{tpu_custom_call.1} parent=1 // pred_check_branch
      %116 = sbr.rel (0) target = $region53
    $region52: #{tpu_custom_call.1} parent=1 // pred_region
      _
    $region53: #{tpu_custom_call.1} parent=1 // pred_fallthru
      _
    // Predicated region
    $region54: #{tpu_custom_call.1} parent=1 // pred_check
      _
    $region55: #{tpu_custom_call.1} parent=1 // pred_check_branch
      %118 = sbr.rel (0) target = $region57
    $region56: #{tpu_custom_call.1} parent=1 // pred_region
      %119 = dma.done [#allocation3], 256
    $region57: #{tpu_custom_call.1} parent=1 // pred_fallthru
      _
    // Predicated region
    $region58: #{tpu_custom_call.1} parent=1 // pred_check
      _
    $region59: #{tpu_custom_call.1} parent=1 // pred_check_branch
      %121 = sbr.rel (0) target = $region61
    $region60: #{tpu_custom_call.1} parent=1 // pred_region
      %122 = dma.done [#allocation6], 16384
    $region61: #{tpu_custom_call.1} parent=1 // pred_fallthru
      _
    // Predicated region
    $region62: #{tpu_custom_call.1} parent=1 // pred_check
      _
    $region63: #{tpu_custom_call.1} parent=1 // pred_check_branch
      %124 = sbr.rel (0) target = $region65
    $region64: #{tpu_custom_call.1} parent=1 // pred_region
      %125 = dma.done [#allocation6], 8192
    $region65: #{tpu_custom_call.1} parent=1 // pred_fallthru
      _
    // Predicated region
    $region66: #{tpu_custom_call.1} parent=1 // pred_check
      _
    $region67: #{tpu_custom_call.1} parent=1 // pred_check_branch
      %127 = sbr.rel (0) target = $region69
    $region68: #{tpu_custom_call.1} parent=1 // pred_region
      %128 = dma.done [#allocation9], 2048
    $region69: #{tpu_custom_call.1} parent=1 // pred_fallthru
      _
    // Predicated region
    $region70: #{tpu_custom_call.1} parent=1 // pred_check
      _
    $region71: #{tpu_custom_call.1} parent=1 // pred_check_branch
      %130 = sbr.rel (0) target = $region73
    $region72: #{tpu_custom_call.1} parent=1 // pred_region
      %131 = dma.done [#allocation9], 2048
    $region73: #{tpu_custom_call.1} parent=1 // pred_fallthru
      _
    // Predicated region
    $region74: #{tpu_custom_call.1} parent=1 // pred_check
      _
    $region75: #{tpu_custom_call.1} parent=1 // pred_check_branch
      %133 = sbr.rel (0) target = $region77
    $region76: #{tpu_custom_call.1} parent=1 // pred_region
      %134 = dma.done [#allocation12], 8192
    $region77: #{tpu_custom_call.1} parent=1 // pred_fallthru
      _
    // Predicated region
    $region78: #{tpu_custom_call.1} parent=1 // pred_check
      _
    $region79: #{tpu_custom_call.1} parent=1 // pred_check_branch
      %136 = sbr.rel (0) target = $region81
    $region80: #{tpu_custom_call.1} parent=1 // pred_region
      %137 = dma.done [#allocation12], 16384
    $region81: #{tpu_custom_call.1} parent=1 // pred_fallthru
      _
    %v138 = vld [vmem:[#allocation2] sm:$0xff]
    %v139 = vld [vmem:[#allocation2 + $0x8] sm:$0xff]
    %v140 = vld [vmem:[#allocation5] sm:$0xff]
    %v141 = vld [vmem:[#allocation5 + $0x8] sm:$0xff]
    %v142 = vld [vmem:[#allocation5 + $0x10] sm:$0xff]
    %v143 = vld [vmem:[#allocation5 + $0x18] sm:$0xff]
    %v144 = vld [vmem:[#allocation5 + $0x20] sm:$0xff]
    %v145 = vld [vmem:[#allocation5 + $0x28] sm:$0xff]
    %v146 = vld [vmem:[#allocation5 + $0x30] sm:$0xff]
    %v147 = vld [vmem:[#allocation5 + $0x38] sm:$0xff]
    %v148 = vld [vmem:[#allocation5 + $0x40] sm:$0xff]
    %v149 = vld [vmem:[#allocation5 + $0x48] sm:$0xff]
    %v150 = vld [vmem:[#allocation5 + $0x50] sm:$0xff]
    %v151 = vld [vmem:[#allocation5 + $0x58] sm:$0xff]
    %v152 = vld [vmem:[#allocation5 + $0x60] sm:$0xff]
    %v153 = vld [vmem:[#allocation5 + $0x68] sm:$0xff]
    %v154 = vld [vmem:[#allocation5 + $0x70] sm:$0xff]
    %v155 = vld [vmem:[#allocation5 + $0x78] sm:$0xff]
    %v156 = vld [vmem:[#allocation5 + $0x80] sm:$0xff]
    %v157 = vld [vmem:[#allocation5 + $0x88] sm:$0xff]
    %v158 = vld [vmem:[#allocation5 + $0x90] sm:$0xff]
    %v159 = vld [vmem:[#allocation5 + $0x98] sm:$0xff]
    %v160 = vld [vmem:[#allocation5 + $0xa0] sm:$0xff]
    %v161 = vld [vmem:[#allocation5 + $0xa8] sm:$0xff]
    %v162 = vld [vmem:[#allocation5 + $0xb0] sm:$0xff]
    %v163 = vld [vmem:[#allocation5 + $0xb8] sm:$0xff]
    %v164 = vld [vmem:[#allocation5 + $0xc0] sm:$0xff]
    %v165 = vld [vmem:[#allocation5 + $0xc8] sm:$0xff]
    %v166 = vld [vmem:[#allocation5 + $0xd0] sm:$0xff]
    %v167 = vld [vmem:[#allocation5 + $0xd8] sm:$0xff]
    %v168 = vld [vmem:[#allocation5 + $0xe0] sm:$0xff]
    %v169 = vld [vmem:[#allocation5 + $0xe8] sm:$0xff]
    %v170 = vld [vmem:[#allocation5 + $0xf0] sm:$0xff]
    %v171 = vld [vmem:[#allocation5 + $0xf8] sm:$0xff]
    %v172 = vld [vmem:[#allocation5 + $0x100] sm:$0xff]
    %v173 = vld [vmem:[#allocation5 + $0x108] sm:$0xff]
    %v174 = vld [vmem:[#allocation5 + $0x110] sm:$0xff]
    %v175 = vld [vmem:[#allocation5 + $0x118] sm:$0xff]
    %v176 = vld [vmem:[#allocation5 + $0x120] sm:$0xff]
    %v177 = vld [vmem:[#allocation5 + $0x128] sm:$0xff]
    %v178 = vld [vmem:[#allocation5 + $0x130] sm:$0xff]
    %v179 = vld [vmem:[#allocation5 + $0x138] sm:$0xff]
    %v180 = vld [vmem:[#allocation5 + $0x140] sm:$0xff]
    %v181 = vld [vmem:[#allocation5 + $0x148] sm:$0xff]
    %v182 = vld [vmem:[#allocation5 + $0x150] sm:$0xff]
    %v183 = vld [vmem:[#allocation5 + $0x158] sm:$0xff]
    %v184 = vld [vmem:[#allocation5 + $0x160] sm:$0xff]
    %v185 = vld [vmem:[#allocation5 + $0x168] sm:$0xff]
    %v186 = vld [vmem:[#allocation5 + $0x170] sm:$0xff]
    %v187 = vld [vmem:[#allocation5 + $0x178] sm:$0xff]
    %v188 = vld [vmem:[#allocation5 + $0x180] sm:$0xff]
    %v189 = vld [vmem:[#allocation5 + $0x188] sm:$0xff]
    %v190 = vld [vmem:[#allocation5 + $0x190] sm:$0xff]
    %v191 = vld [vmem:[#allocation5 + $0x198] sm:$0xff]
    %v192 = vld [vmem:[#allocation5 + $0x1a0] sm:$0xff]
    %v193 = vld [vmem:[#allocation5 + $0x1a8] sm:$0xff]
    %v194 = vld [vmem:[#allocation5 + $0x1b0] sm:$0xff]
    %v195 = vld [vmem:[#allocation5 + $0x1b8] sm:$0xff]
    %v196 = vld [vmem:[#allocation5 + $0x1c0] sm:$0xff]
    %v197 = vld [vmem:[#allocation5 + $0x1c8] sm:$0xff]
    %v198 = vld [vmem:[#allocation5 + $0x1d0] sm:$0xff]
    %v199 = vld [vmem:[#allocation5 + $0x1d8] sm:$0xff]
    %v200 = vld [vmem:[#allocation5 + $0x1e0] sm:$0xff]
    %v201 = vld [vmem:[#allocation5 + $0x1e8] sm:$0xff]
    %v202 = vld [vmem:[#allocation5 + $0x1f0] sm:$0xff]
    %v203 = vld [vmem:[#allocation5 + $0x1f8] sm:$0xff]
    %v204 = vld [vmem:[#allocation5 + $0x200] sm:$0xff]
    %v205 = vld [vmem:[#allocation5 + $0x208] sm:$0xff]
    %v206 = vld [vmem:[#allocation5 + $0x210] sm:$0xff]
    %v207 = vld [vmem:[#allocation5 + $0x218] sm:$0xff]
    %v208 = vld [vmem:[#allocation5 + $0x220] sm:$0xff]
    %v209 = vld [vmem:[#allocation5 + $0x228] sm:$0xff]
    %v210 = vld [vmem:[#allocation5 + $0x230] sm:$0xff]
    %v211 = vld [vmem:[#allocation5 + $0x238] sm:$0xff]
    %v212 = vld [vmem:[#allocation5 + $0x240] sm:$0xff]
    %v213 = vld [vmem:[#allocation5 + $0x248] sm:$0xff]
    %v214 = vld [vmem:[#allocation5 + $0x250] sm:$0xff]
    %v215 = vld [vmem:[#allocation5 + $0x258] sm:$0xff]
    %v216 = vld [vmem:[#allocation5 + $0x260] sm:$0xff]
    %v217 = vld [vmem:[#allocation5 + $0x268] sm:$0xff]
    %v218 = vld [vmem:[#allocation5 + $0x270] sm:$0xff]
    %v219 = vld [vmem:[#allocation5 + $0x278] sm:$0xff]
    %v220 = vld [vmem:[#allocation5 + $0x280] sm:$0xff]
    %v221 = vld [vmem:[#allocation5 + $0x288] sm:$0xff]
    %v222 = vld [vmem:[#allocation5 + $0x290] sm:$0xff]
    %v223 = vld [vmem:[#allocation5 + $0x298] sm:$0xff]
    %v224 = vld [vmem:[#allocation5 + $0x2a0] sm:$0xff]
    %v225 = vld [vmem:[#allocation5 + $0x2a8] sm:$0xff]
    %v226 = vld [vmem:[#allocation5 + $0x2b0] sm:$0xff]
    %v227 = vld [vmem:[#allocation5 + $0x2b8] sm:$0xff]
    %v228 = vld [vmem:[#allocation5 + $0x2c0] sm:$0xff]
    %v229 = vld [vmem:[#allocation5 + $0x2c8] sm:$0xff]
    %v230 = vld [vmem:[#allocation5 + $0x2d0] sm:$0xff]
    %v231 = vld [vmem:[#allocation5 + $0x2d8] sm:$0xff]
    %v232 = vld [vmem:[#allocation5 + $0x2e0] sm:$0xff]
    %v233 = vld [vmem:[#allocation5 + $0x2e8] sm:$0xff]
    %v234 = vld [vmem:[#allocation5 + $0x2f0] sm:$0xff]
    %v235 = vld [vmem:[#allocation5 + $0x2f8] sm:$0xff]
    %v236 = vld [vmem:[#allocation5 + $0x300] sm:$0xff]
    %v237 = vld [vmem:[#allocation5 + $0x308] sm:$0xff]
    %v238 = vld [vmem:[#allocation5 + $0x310] sm:$0xff]
    %v239 = vld [vmem:[#allocation5 + $0x318] sm:$0xff]
    %v240 = vld [vmem:[#allocation5 + $0x320] sm:$0xff]
    %v241 = vld [vmem:[#allocation5 + $0x328] sm:$0xff]
    %v242 = vld [vmem:[#allocation5 + $0x330] sm:$0xff]
    %v243 = vld [vmem:[#allocation5 + $0x338] sm:$0xff]
    %v244 = vld [vmem:[#allocation5 + $0x340] sm:$0xff]
    %v245 = vld [vmem:[#allocation5 + $0x348] sm:$0xff]
    %v246 = vld [vmem:[#allocation5 + $0x350] sm:$0xff]
    %v247 = vld [vmem:[#allocation5 + $0x358] sm:$0xff]
    %v248 = vld [vmem:[#allocation5 + $0x360] sm:$0xff]
    %v249 = vld [vmem:[#allocation5 + $0x368] sm:$0xff]
    %v250 = vld [vmem:[#allocation5 + $0x370] sm:$0xff]
    %v251 = vld [vmem:[#allocation5 + $0x378] sm:$0xff]
    %v252 = vld [vmem:[#allocation5 + $0x380] sm:$0xff]
    %v253 = vld [vmem:[#allocation5 + $0x388] sm:$0xff]
    %v254 = vld [vmem:[#allocation5 + $0x390] sm:$0xff]
    %v255 = vld [vmem:[#allocation5 + $0x398] sm:$0xff]
    %v256 = vld [vmem:[#allocation5 + $0x3a0] sm:$0xff]
    %v257 = vld [vmem:[#allocation5 + $0x3a8] sm:$0xff]
    %v258 = vld [vmem:[#allocation5 + $0x3b0] sm:$0xff]
    %v259 = vld [vmem:[#allocation5 + $0x3b8] sm:$0xff]
    %v260 = vld [vmem:[#allocation5 + $0x3c0] sm:$0xff]
    %v261 = vld [vmem:[#allocation5 + $0x3c8] sm:$0xff]
    %v262 = vld [vmem:[#allocation5 + $0x3d0] sm:$0xff]
    %v263 = vld [vmem:[#allocation5 + $0x3d8] sm:$0xff]
    %v264 = vld [vmem:[#allocation5 + $0x3e0] sm:$0xff]
    %v265 = vld [vmem:[#allocation5 + $0x3e8] sm:$0xff]
    %v266 = vld [vmem:[#allocation5 + $0x3f0] sm:$0xff]
    %v267 = vld [vmem:[#allocation5 + $0x3f8] sm:$0xff]
    %v268 = vld [vmem:[%s2] sm:$0xf]
    %v270 = vlaneseq
    %v271 = vshrl.u32 %v270, 7
    %v272 = vsub.s32 0, %v271
    %v273 = vrot.slane %v268, %v272
    %v274 = vlaneseq
    %v275 = vshrl.u32 %v274, 7
    %v276 = vsub.s32 1, %v275
    %v277 = vrot.slane %v268, %v276
    %v278 = vlaneseq
    %v279 = vshrl.u32 %v278, 7
    %v280 = vsub.s32 2, %v279
    %v281 = vrot.slane %v268, %v280
    %v282 = vlaneseq
    %v283 = vshrl.u32 %v282, 7
    %v284 = vsub.s32 3, %v283
    %v285 = vrot.slane %v268, %v284
    %290 = vmatprep.subr.mxu0 %v141
    %291 = vmatpush1.msra.mxu0 %v140
    %292 = vmatprep.subr.mxu0 %v145
    %293 = vmatpush1.msra.mxu0 %v144
    %294 = vmatprep.subr.mxu0 %v149
    %295 = vmatpush1.msra.mxu0 %v148
    %296 = vmatprep.subr.mxu0 %v153
    %297 = vmatpush1.msra.mxu0 %v152
    %298 = vmatprep.subr.mxu0 %v157
    %299 = vmatpush1.msra.mxu0 %v156
    %300 = vmatprep.subr.mxu0 %v161
    %301 = vmatpush1.msra.mxu0 %v160
    %302 = vmatprep.subr.mxu0 %v165
    %303 = vmatpush1.msra.mxu0 %v164
    %304 = vmatprep.subr.mxu0 %v169
    %305 = vmatpush1.msra.mxu0 %v168
    %306 = vmatprep.subr.mxu0 %v173
    %307 = vmatpush1.msra.mxu0 %v172
    %308 = vmatprep.subr.mxu0 %v177
    %309 = vmatpush1.msra.mxu0 %v176
    %310 = vmatprep.subr.mxu0 %v181
    %311 = vmatpush1.msra.mxu0 %v180
    %312 = vmatprep.subr.mxu0 %v185
    %313 = vmatpush1.msra.mxu0 %v184
    %314 = vmatprep.subr.mxu0 %v189
    %315 = vmatpush1.msra.mxu0 %v188
    %316 = vmatprep.subr.mxu0 %v193
    %317 = vmatpush1.msra.mxu0 %v192
    %318 = vmatprep.subr.mxu0 %v197
    %319 = vmatpush1.msra.mxu0 %v196
    %320 = vmatprep.subr.mxu0 %v201
    %321 = vmatpush1.msra.mxu0 %v200
    %322 = vmatprep.subr.mxu0 %v205
    %323 = vmatpush1.msra.mxu0 %v204
    %324 = vmatprep.subr.mxu0 %v209
    %325 = vmatpush1.msra.mxu0 %v208
    %326 = vmatprep.subr.mxu0 %v213
    %327 = vmatpush1.msra.mxu0 %v212
    %328 = vmatprep.subr.mxu0 %v217
    %329 = vmatpush1.msra.mxu0 %v216
    %330 = vmatprep.subr.mxu0 %v221
    %331 = vmatpush1.msra.mxu0 %v220
    %332 = vmatprep.subr.mxu0 %v225
    %333 = vmatpush1.msra.mxu0 %v224
    %334 = vmatprep.subr.mxu0 %v229
    %335 = vmatpush1.msra.mxu0 %v228
    %336 = vmatprep.subr.mxu0 %v233
    %337 = vmatpush1.msra.mxu0 %v232
    %338 = vmatprep.subr.mxu0 %v237
    %339 = vmatpush1.msra.mxu0 %v236
    %340 = vmatprep.subr.mxu0 %v241
    %341 = vmatpush1.msra.mxu0 %v240
    %342 = vmatprep.subr.mxu0 %v245
    %343 = vmatpush1.msra.mxu0 %v244
    %344 = vmatprep.subr.mxu0 %v249
    %345 = vmatpush1.msra.mxu0 %v248
    %346 = vmatprep.subr.mxu0 %v253
    %347 = vmatpush1.msra.mxu0 %v252
    %348 = vmatprep.subr.mxu0 %v257
    %349 = vmatpush1.msra.mxu0 %v256
    %350 = vmatprep.subr.mxu0 %v261
    %351 = vmatpush1.msra.mxu0 %v260
    %352 = vmatprep.subr.mxu0 %v265
    %353 = vmatpush1.msra.mxu0 %v264
    %354 = vmatprep.mubr.f32.mxu0 %v139
    %355 = vmatmul.mubr.f32.gmra.mrb[0].mxu0 %v138
    %v356 = vpop.f32.mrb[0].mxu0
    %v357 = vadd.f32 %v273, %v356
    %v358 = vpop.f32.mrb[0].mxu0
    %v359 = vadd.f32 %v277, %v358
    %360 = vdwg.mxu0
    %361 = vmatprep.subr.mxu0 %v143
    %362 = vmatpush1.msra.mxu0 %v142
    %363 = vmatprep.subr.mxu0 %v147
    %364 = vmatpush1.msra.mxu0 %v146
    %365 = vmatprep.subr.mxu0 %v151
    %366 = vmatpush1.msra.mxu0 %v150
    %367 = vmatprep.subr.mxu0 %v155
    %368 = vmatpush1.msra.mxu0 %v154
    %369 = vmatprep.subr.mxu0 %v159
    %370 = vmatpush1.msra.mxu0 %v158
    %371 = vmatprep.subr.mxu0 %v163
    %372 = vmatpush1.msra.mxu0 %v162
    %373 = vmatprep.subr.mxu0 %v167
    %374 = vmatpush1.msra.mxu0 %v166
    %375 = vmatprep.subr.mxu0 %v171
    %376 = vmatpush1.msra.mxu0 %v170
    %377 = vmatprep.subr.mxu0 %v175
    %378 = vmatpush1.msra.mxu0 %v174
    %379 = vmatprep.subr.mxu0 %v179
    %380 = vmatpush1.msra.mxu0 %v178
    %381 = vmatprep.subr.mxu0 %v183
    %382 = vmatpush1.msra.mxu0 %v182
    %383 = vmatprep.subr.mxu0 %v187
    %384 = vmatpush1.msra.mxu0 %v186
    %385 = vmatprep.subr.mxu0 %v191
    %386 = vmatpush1.msra.mxu0 %v190
    %387 = vmatprep.subr.mxu0 %v195
    %388 = vmatpush1.msra.mxu0 %v194
    %389 = vmatprep.subr.mxu0 %v199
    %390 = vmatpush1.msra.mxu0 %v198
    %391 = vmatprep.subr.mxu0 %v203
    %392 = vmatpush1.msra.mxu0 %v202
    %393 = vmatprep.subr.mxu0 %v207
    %394 = vmatpush1.msra.mxu0 %v206
    %395 = vmatprep.subr.mxu0 %v211
    %396 = vmatpush1.msra.mxu0 %v210
    %397 = vmatprep.subr.mxu0 %v215
    %398 = vmatpush1.msra.mxu0 %v214
    %399 = vmatprep.subr.mxu0 %v219
    %400 = vmatpush1.msra.mxu0 %v218
    %401 = vmatprep.subr.mxu0 %v223
    %402 = vmatpush1.msra.mxu0 %v222
    %403 = vmatprep.subr.mxu0 %v227
    %404 = vmatpush1.msra.mxu0 %v226
    %405 = vmatprep.subr.mxu0 %v231
    %406 = vmatpush1.msra.mxu0 %v230
    %407 = vmatprep.subr.mxu0 %v235
    %408 = vmatpush1.msra.mxu0 %v234
    %409 = vmatprep.subr.mxu0 %v239
    %410 = vmatpush1.msra.mxu0 %v238
    %411 = vmatprep.subr.mxu0 %v243
    %412 = vmatpush1.msra.mxu0 %v242
    %413 = vmatprep.subr.mxu0 %v247
    %414 = vmatpush1.msra.mxu0 %v246
    %415 = vmatprep.subr.mxu0 %v251
    %416 = vmatpush1.msra.mxu0 %v250
    %417 = vmatprep.subr.mxu0 %v255
    %418 = vmatpush1.msra.mxu0 %v254
    %419 = vmatprep.subr.mxu0 %v259
    %420 = vmatpush1.msra.mxu0 %v258
    %421 = vmatprep.subr.mxu0 %v263
    %422 = vmatpush1.msra.mxu0 %v262
    %423 = vmatprep.subr.mxu0 %v267
    %424 = vmatpush1.msra.mxu0 %v266
    %425 = vmatprep.mubr.f32.mxu0 %v139
    %426 = vmatmul.mubr.f32.gmra.mrb[0].mxu0 %v138
    %v427 = vpop.f32.mrb[0].mxu0
    %v428 = vadd.f32 %v281, %v427
    %v429 = vpop.f32.mrb[0].mxu0
    %v430 = vadd.f32 %v285, %v429
    %431 = vdwg.mxu0
    %v432 = vmax.f32 %v357, 0.0
    %v433 = vmax.f32 %v359, 0.0
    %v434 = vmax.f32 %v428, 0.0
    %v435 = vmax.f32 %v430, 0.0
    %v436 = vld [vmem:[#allocation7] sm:$0xff]
    %v437 = vld [vmem:[#allocation7 + $0x8] sm:$0xff]
    %v438 = vld [vmem:[#allocation7 + $0x10] sm:$0xff]
    %v439 = vld [vmem:[#allocation7 + $0x18] sm:$0xff]
    %v440 = vld [vmem:[#allocation7 + $0x20] sm:$0xff]
    %v441 = vld [vmem:[#allocation7 + $0x28] sm:$0xff]
    %v442 = vld [vmem:[#allocation7 + $0x30] sm:$0xff]
    %v443 = vld [vmem:[#allocation7 + $0x38] sm:$0xff]
    %v444 = vld [vmem:[#allocation7 + $0x40] sm:$0xff]
    %v445 = vld [vmem:[#allocation7 + $0x48] sm:$0xff]
    %v446 = vld [vmem:[#allocation7 + $0x50] sm:$0xff]
    %v447 = vld [vmem:[#allocation7 + $0x58] sm:$0xff]
    %v448 = vld [vmem:[#allocation7 + $0x60] sm:$0xff]
    %v449 = vld [vmem:[#allocation7 + $0x68] sm:$0xff]
    %v450 = vld [vmem:[#allocation7 + $0x70] sm:$0xff]
    %v451 = vld [vmem:[#allocation7 + $0x78] sm:$0xff]
    %v452 = vld [vmem:[#allocation7 + $0x80] sm:$0xff]
    %v453 = vld [vmem:[#allocation7 + $0x88] sm:$0xff]
    %v454 = vld [vmem:[#allocation7 + $0x90] sm:$0xff]
    %v455 = vld [vmem:[#allocation7 + $0x98] sm:$0xff]
    %v456 = vld [vmem:[#allocation7 + $0xa0] sm:$0xff]
    %v457 = vld [vmem:[#allocation7 + $0xa8] sm:$0xff]
    %v458 = vld [vmem:[#allocation7 + $0xb0] sm:$0xff]
    %v459 = vld [vmem:[#allocation7 + $0xb8] sm:$0xff]
    %v460 = vld [vmem:[#allocation7 + $0xc0] sm:$0xff]
    %v461 = vld [vmem:[#allocation7 + $0xc8] sm:$0xff]
    %v462 = vld [vmem:[#allocation7 + $0xd0] sm:$0xff]
    %v463 = vld [vmem:[#allocation7 + $0xd8] sm:$0xff]
    %v464 = vld [vmem:[#allocation7 + $0xe0] sm:$0xff]
    %v465 = vld [vmem:[#allocation7 + $0xe8] sm:$0xff]
    %v466 = vld [vmem:[#allocation7 + $0xf0] sm:$0xff]
    %v467 = vld [vmem:[#allocation7 + $0xf8] sm:$0xff]
    %v468 = vld [vmem:[#allocation7 + $0x100] sm:$0xff]
    %v469 = vld [vmem:[#allocation7 + $0x108] sm:$0xff]
    %v470 = vld [vmem:[#allocation7 + $0x110] sm:$0xff]
    %v471 = vld [vmem:[#allocation7 + $0x118] sm:$0xff]
    %v472 = vld [vmem:[#allocation7 + $0x120] sm:$0xff]
    %v473 = vld [vmem:[#allocation7 + $0x128] sm:$0xff]
    %v474 = vld [vmem:[#allocation7 + $0x130] sm:$0xff]
    %v475 = vld [vmem:[#allocation7 + $0x138] sm:$0xff]
    %v476 = vld [vmem:[#allocation7 + $0x140] sm:$0xff]
    %v477 = vld [vmem:[#allocation7 + $0x148] sm:$0xff]
    %v478 = vld [vmem:[#allocation7 + $0x150] sm:$0xff]
    %v479 = vld [vmem:[#allocation7 + $0x158] sm:$0xff]
    %v480 = vld [vmem:[#allocation7 + $0x160] sm:$0xff]
    %v481 = vld [vmem:[#allocation7 + $0x168] sm:$0xff]
    %v482 = vld [vmem:[#allocation7 + $0x170] sm:$0xff]
    %v483 = vld [vmem:[#allocation7 + $0x178] sm:$0xff]
    %v484 = vld [vmem:[#allocation7 + $0x180] sm:$0xff]
    %v485 = vld [vmem:[#allocation7 + $0x188] sm:$0xff]
    %v486 = vld [vmem:[#allocation7 + $0x190] sm:$0xff]
    %v487 = vld [vmem:[#allocation7 + $0x198] sm:$0xff]
    %v488 = vld [vmem:[#allocation7 + $0x1a0] sm:$0xff]
    %v489 = vld [vmem:[#allocation7 + $0x1a8] sm:$0xff]
    %v490 = vld [vmem:[#allocation7 + $0x1b0] sm:$0xff]
    %v491 = vld [vmem:[#allocation7 + $0x1b8] sm:$0xff]
    %v492 = vld [vmem:[#allocation7 + $0x1c0] sm:$0xff]
    %v493 = vld [vmem:[#allocation7 + $0x1c8] sm:$0xff]
    %v494 = vld [vmem:[#allocation7 + $0x1d0] sm:$0xff]
    %v495 = vld [vmem:[#allocation7 + $0x1d8] sm:$0xff]
    %v496 = vld [vmem:[#allocation7 + $0x1e0] sm:$0xff]
    %v497 = vld [vmem:[#allocation7 + $0x1e8] sm:$0xff]
    %v498 = vld [vmem:[#allocation7 + $0x1f0] sm:$0xff]
    %v499 = vld [vmem:[#allocation7 + $0x1f8] sm:$0xff]
    %v500 = vld [vmem:[%s4] sm:$0x1]
    %v502 = vlaneseq
    %v503 = vshrl.u32 %v502, 7
    %v504 = vsub.s32 0, %v503
    %v505 = vrot.slane %v500, %v504
    %507 = vmatprep.subr.mxu0 0.0
    %508 = vmatpush1.msra.mxu0 %v436
    %509 = vmatprep.subr.mxu0 0.0
    %510 = vmatpush1.msra.mxu0 %v437
    %511 = vmatprep.subr.mxu0 0.0
    %512 = vmatpush1.msra.mxu0 %v438
    %513 = vmatprep.subr.mxu0 0.0
    %514 = vmatpush1.msra.mxu0 %v439
    %515 = vmatprep.subr.mxu0 0.0
    %516 = vmatpush1.msra.mxu0 %v440
    %517 = vmatprep.subr.mxu0 0.0
    %518 = vmatpush1.msra.mxu0 %v441
    %519 = vmatprep.subr.mxu0 0.0
    %520 = vmatpush1.msra.mxu0 %v442
    %521 = vmatprep.subr.mxu0 0.0
    %522 = vmatpush1.msra.mxu0 %v443
    %523 = vmatprep.subr.mxu0 0.0
    %524 = vmatpush1.msra.mxu0 %v444
    %525 = vmatprep.subr.mxu0 0.0
    %526 = vmatpush1.msra.mxu0 %v445
    %527 = vmatprep.subr.mxu0 0.0
    %528 = vmatpush1.msra.mxu0 %v446
    %529 = vmatprep.subr.mxu0 0.0
    %530 = vmatpush1.msra.mxu0 %v447
    %531 = vmatprep.subr.mxu0 0.0
    %532 = vmatpush1.msra.mxu0 %v448
    %533 = vmatprep.subr.mxu0 0.0
    %534 = vmatpush1.msra.mxu0 %v449
    %535 = vmatprep.subr.mxu0 0.0
    %536 = vmatpush1.msra.mxu0 %v450
    %537 = vmatprep.subr.mxu0 0.0
    %538 = vmatpush1.msra.mxu0 %v451
    %539 = vmatprep.subr.mxu0 0.0
    %540 = vmatpush1.msra.mxu0 %v452
    %541 = vmatprep.subr.mxu0 0.0
    %542 = vmatpush1.msra.mxu0 %v453
    %543 = vmatprep.subr.mxu0 0.0
    %544 = vmatpush1.msra.mxu0 %v454
    %545 = vmatprep.subr.mxu0 0.0
    %546 = vmatpush1.msra.mxu0 %v455
    %547 = vmatprep.subr.mxu0 0.0
    %548 = vmatpush1.msra.mxu0 %v456
    %549 = vmatprep.subr.mxu0 0.0
    %550 = vmatpush1.msra.mxu0 %v457
    %551 = vmatprep.subr.mxu0 0.0
    %552 = vmatpush1.msra.mxu0 %v458
    %553 = vmatprep.subr.mxu0 0.0
    %554 = vmatpush1.msra.mxu0 %v459
    %555 = vmatprep.subr.mxu0 0.0
    %556 = vmatpush1.msra.mxu0 %v460
    %557 = vmatprep.subr.mxu0 0.0
    %558 = vmatpush1.msra.mxu0 %v461
    %559 = vmatprep.subr.mxu0 0.0
    %560 = vmatpush1.msra.mxu0 %v462
    %561 = vmatprep.subr.mxu0 0.0
    %562 = vmatpush1.msra.mxu0 %v463
    %563 = vmatprep.subr.mxu0 0.0
    %564 = vmatpush1.msra.mxu0 %v464
    %565 = vmatprep.subr.mxu0 0.0
    %566 = vmatpush1.msra.mxu0 %v465
    %567 = vmatprep.subr.mxu0 0.0
    %568 = vmatpush1.msra.mxu0 %v466
    %569 = vmatprep.subr.mxu0 0.0
    %570 = vmatpush1.msra.mxu0 %v467
    %571 = vmatprep.mubr.f32.mxu0 %v433
    %572 = vmatmul.mubr.f32.gmra.mrb[0].mxu0 %v432
    %v573 = vpop.f32.mrb[0].mxu0
    %v574 = vadd.f32 %v505, %v573
    %v575 = vpop.f32.mrb[0].mxu0
    %576 = vdwg.mxu0
    %577 = vmatprep.subr.mxu0 0.0
    %578 = vmatpush1.msra.mxu0 %v468
    %579 = vmatprep.subr.mxu0 0.0
    %580 = vmatpush1.msra.mxu0 %v469
    %581 = vmatprep.subr.mxu0 0.0
    %582 = vmatpush1.msra.mxu0 %v470
    %583 = vmatprep.subr.mxu0 0.0
    %584 = vmatpush1.msra.mxu0 %v471
    %585 = vmatprep.subr.mxu0 0.0
    %586 = vmatpush1.msra.mxu0 %v472
    %587 = vmatprep.subr.mxu0 0.0
    %588 = vmatpush1.msra.mxu0 %v473
    %589 = vmatprep.subr.mxu0 0.0
    %590 = vmatpush1.msra.mxu0 %v474
    %591 = vmatprep.subr.mxu0 0.0
    %592 = vmatpush1.msra.mxu0 %v475
    %593 = vmatprep.subr.mxu0 0.0
    %594 = vmatpush1.msra.mxu0 %v476
    %595 = vmatprep.subr.mxu0 0.0
    %596 = vmatpush1.msra.mxu0 %v477
    %597 = vmatprep.subr.mxu0 0.0
    %598 = vmatpush1.msra.mxu0 %v478
    %599 = vmatprep.subr.mxu0 0.0
    %600 = vmatpush1.msra.mxu0 %v479
    %601 = vmatprep.subr.mxu0 0.0
    %602 = vmatpush1.msra.mxu0 %v480
    %603 = vmatprep.subr.mxu0 0.0
    %604 = vmatpush1.msra.mxu0 %v481
    %605 = vmatprep.subr.mxu0 0.0
    %606 = vmatpush1.msra.mxu0 %v482
    %607 = vmatprep.subr.mxu0 0.0
    %608 = vmatpush1.msra.mxu0 %v483
    %609 = vmatprep.subr.mxu0 0.0
    %610 = vmatpush1.msra.mxu0 %v484
    %611 = vmatprep.subr.mxu0 0.0
    %612 = vmatpush1.msra.mxu0 %v485
    %613 = vmatprep.subr.mxu0 0.0
    %614 = vmatpush1.msra.mxu0 %v486
    %615 = vmatprep.subr.mxu0 0.0
    %616 = vmatpush1.msra.mxu0 %v487
    %617 = vmatprep.subr.mxu0 0.0
    %618 = vmatpush1.msra.mxu0 %v488
    %619 = vmatprep.subr.mxu0 0.0
    %620 = vmatpush1.msra.mxu0 %v489
    %621 = vmatprep.subr.mxu0 0.0
    %622 = vmatpush1.msra.mxu0 %v490
    %623 = vmatprep.subr.mxu0 0.0
    %624 = vmatpush1.msra.mxu0 %v491
    %625 = vmatprep.subr.mxu0 0.0
    %626 = vmatpush1.msra.mxu0 %v492
    %627 = vmatprep.subr.mxu0 0.0
    %628 = vmatpush1.msra.mxu0 %v493
    %629 = vmatprep.subr.mxu0 0.0
    %630 = vmatpush1.msra.mxu0 %v494
    %631 = vmatprep.subr.mxu0 0.0
    %632 = vmatpush1.msra.mxu0 %v495
    %633 = vmatprep.subr.mxu0 0.0
    %634 = vmatpush1.msra.mxu0 %v496
    %635 = vmatprep.subr.mxu0 0.0
    %636 = vmatpush1.msra.mxu0 %v497
    %637 = vmatprep.subr.mxu0 0.0
    %638 = vmatpush1.msra.mxu0 %v498
    %639 = vmatprep.subr.mxu0 0.0
    %640 = vmatpush1.msra.mxu0 %v499
    %641 = vmatprep.mubr.f32.mxu0 %v435
    %642 = vmatmul.mubr.f32.gmra.mrb[0].mxu0 %v434
    %v643 = vpop.f32.mrb[0].mxu0
    %v644 = vadd.f32 %v574, %v643
    %v645 = vpop.f32.mrb[0].mxu0
    %646 = vdwg.mxu0
    %v647 = vmax.f32 %v644, 0.0
    %v648 = vld [vmem:[#allocation8] sm:$0xff]
    %v649 = vld [vmem:[#allocation8 + $0x8] sm:$0xff]
    %v650 = vld [vmem:[#allocation8 + $0x10] sm:$0xff]
    %v651 = vld [vmem:[#allocation8 + $0x18] sm:$0xff]
    %v652 = vld [vmem:[#allocation8 + $0x20] sm:$0xff]
    %v653 = vld [vmem:[#allocation8 + $0x28] sm:$0xff]
    %v654 = vld [vmem:[#allocation8 + $0x30] sm:$0xff]
    %v655 = vld [vmem:[#allocation8 + $0x38] sm:$0xff]
    %v656 = vld [vmem:[#allocation8 + $0x40] sm:$0xff]
    %v657 = vld [vmem:[#allocation8 + $0x48] sm:$0xff]
    %v658 = vld [vmem:[#allocation8 + $0x50] sm:$0xff]
    %v659 = vld [vmem:[#allocation8 + $0x58] sm:$0xff]
    %v660 = vld [vmem:[#allocation8 + $0x60] sm:$0xff]
    %v661 = vld [vmem:[#allocation8 + $0x68] sm:$0xff]
    %v662 = vld [vmem:[#allocation8 + $0x70] sm:$0xff]
    %v663 = vld [vmem:[#allocation8 + $0x78] sm:$0xff]
    %v664 = vld [vmem:[%s6] sm:$0x1]
    %v666 = vlaneseq
    %v667 = vshrl.u32 %v666, 7
    %v668 = vsub.s32 0, %v667
    %v669 = vrot.slane %v664, %v668
    %671 = vmatprep.subr.mxu0 0.0
    %672 = vmatpush1.msra.mxu0 %v648
    %673 = vmatprep.subr.mxu0 0.0
    %674 = vmatpush1.msra.mxu0 %v649
    %675 = vmatprep.subr.mxu0 0.0
    %676 = vmatpush1.msra.mxu0 %v650
    %677 = vmatprep.subr.mxu0 0.0
    %678 = vmatpush1.msra.mxu0 %v651
    %679 = vmatprep.subr.mxu0 0.0
    %680 = vmatpush1.msra.mxu0 %v652
    %681 = vmatprep.subr.mxu0 0.0
    %682 = vmatpush1.msra.mxu0 %v653
    %683 = vmatprep.subr.mxu0 0.0
    %684 = vmatpush1.msra.mxu0 %v654
    %685 = vmatprep.subr.mxu0 0.0
    %686 = vmatpush1.msra.mxu0 %v655
    %687 = vmatprep.subr.mxu0 0.0
    %688 = vmatpush1.msra.mxu0 %v656
    %689 = vmatprep.subr.mxu0 0.0
    %690 = vmatpush1.msra.mxu0 %v657
    %691 = vmatprep.subr.mxu0 0.0
    %692 = vmatpush1.msra.mxu0 %v658
    %693 = vmatprep.subr.mxu0 0.0
    %694 = vmatpush1.msra.mxu0 %v659
    %695 = vmatprep.subr.mxu0 0.0
    %696 = vmatpush1.msra.mxu0 %v660
    %697 = vmatprep.subr.mxu0 0.0
    %698 = vmatpush1.msra.mxu0 %v661
    %699 = vmatprep.subr.mxu0 0.0
    %700 = vmatpush1.msra.mxu0 %v662
    %701 = vmatprep.subr.mxu0 0.0
    %702 = vmatpush1.msra.mxu0 %v663
    %703 = vmatprep.subr.mxu0 0.0
    %704 = vmatpush1.msra.mxu0 0.0
    %705 = vmatprep.subr.mxu0 0.0
    %706 = vmatpush1.msra.mxu0 0.0
    %707 = vmatprep.subr.mxu0 0.0
    %708 = vmatpush1.msra.mxu0 0.0
    %709 = vmatprep.subr.mxu0 0.0
    %710 = vmatpush1.msra.mxu0 0.0
    %711 = vmatprep.subr.mxu0 0.0
    %712 = vmatpush1.msra.mxu0 0.0
    %713 = vmatprep.subr.mxu0 0.0
    %714 = vmatpush1.msra.mxu0 0.0
    %715 = vmatprep.subr.mxu0 0.0
    %716 = vmatpush1.msra.mxu0 0.0
    %717 = vmatprep.subr.mxu0 0.0
    %718 = vmatpush1.msra.mxu0 0.0
    %719 = vmatprep.subr.mxu0 0.0
    %720 = vmatpush1.msra.mxu0 0.0
    %721 = vmatprep.subr.mxu0 0.0
    %722 = vmatpush1.msra.mxu0 0.0
    %723 = vmatprep.subr.mxu0 0.0
    %724 = vmatpush1.msra.mxu0 0.0
    %725 = vmatprep.subr.mxu0 0.0
    %726 = vmatpush1.msra.mxu0 0.0
    %727 = vmatprep.subr.mxu0 0.0
    %728 = vmatpush1.msra.mxu0 0.0
    %729 = vmatprep.subr.mxu0 0.0
    %730 = vmatpush1.msra.mxu0 0.0
    %731 = vmatprep.subr.mxu0 0.0
    %732 = vmatpush1.msra.mxu0 0.0
    %733 = vmatprep.subr.mxu0 0.0
    %734 = vmatpush1.msra.mxu0 0.0
    %735 = vmatprep.mubr.f32.mxu0 0.0
    %736 = vmatmul.mubr.f32.gmra.mrb[0].mxu0 %v647
    %v737 = vpop.f32.mrb[0].mxu0
    %v738 = vadd.f32 %v669, %v737
    %v739 = vpop.f32.mrb[0].mxu0
    %740 = vdwg.mxu0
    %v741 = vmax.f32 %v738, 0.0
    %v742 = vld [vmem:[#allocation10] sm:$0xff]
    %v743 = vld [vmem:[#allocation10 + $0x8] sm:$0xff]
    %v744 = vld [vmem:[#allocation10 + $0x10] sm:$0xff]
    %v745 = vld [vmem:[#allocation10 + $0x18] sm:$0xff]
    %v746 = vld [vmem:[#allocation10 + $0x20] sm:$0xff]
    %v747 = vld [vmem:[#allocation10 + $0x28] sm:$0xff]
    %v748 = vld [vmem:[#allocation10 + $0x30] sm:$0xff]
    %v749 = vld [vmem:[#allocation10 + $0x38] sm:$0xff]
    %v750 = vld [vmem:[#allocation10 + $0x40] sm:$0xff]
    %v751 = vld [vmem:[#allocation10 + $0x48] sm:$0xff]
    %v752 = vld [vmem:[#allocation10 + $0x50] sm:$0xff]
    %v753 = vld [vmem:[#allocation10 + $0x58] sm:$0xff]
    %v754 = vld [vmem:[#allocation10 + $0x60] sm:$0xff]
    %v755 = vld [vmem:[#allocation10 + $0x68] sm:$0xff]
    %v756 = vld [vmem:[#allocation10 + $0x70] sm:$0xff]
    %v757 = vld [vmem:[#allocation10 + $0x78] sm:$0xff]
    %v758 = vld [vmem:[%s8] sm:$0x1]
    %v760 = vlaneseq
    %v761 = vshrl.u32 %v760, 7
    %v762 = vsub.s32 0, %v761
    %v763 = vrot.slane %v758, %v762
    %765 = vmatprep.subr.mxu0 0.0
    %766 = vmatpush1.msra.mxu0 %v742
    %767 = vmatprep.subr.mxu0 0.0
    %768 = vmatpush1.msra.mxu0 %v743
    %769 = vmatprep.subr.mxu0 0.0
    %770 = vmatpush1.msra.mxu0 %v744
    %771 = vmatprep.subr.mxu0 0.0
    %772 = vmatpush1.msra.mxu0 %v745
    %773 = vmatprep.subr.mxu0 0.0
    %774 = vmatpush1.msra.mxu0 %v746
    %775 = vmatprep.subr.mxu0 0.0
    %776 = vmatpush1.msra.mxu0 %v747
    %777 = vmatprep.subr.mxu0 0.0
    %778 = vmatpush1.msra.mxu0 %v748
    %779 = vmatprep.subr.mxu0 0.0
    %780 = vmatpush1.msra.mxu0 %v749
    %781 = vmatprep.subr.mxu0 0.0
    %782 = vmatpush1.msra.mxu0 %v750
    %783 = vmatprep.subr.mxu0 0.0
    %784 = vmatpush1.msra.mxu0 %v751
    %785 = vmatprep.subr.mxu0 0.0
    %786 = vmatpush1.msra.mxu0 %v752
    %787 = vmatprep.subr.mxu0 0.0
    %788 = vmatpush1.msra.mxu0 %v753
    %789 = vmatprep.subr.mxu0 0.0
    %790 = vmatpush1.msra.mxu0 %v754
    %791 = vmatprep.subr.mxu0 0.0
    %792 = vmatpush1.msra.mxu0 %v755
    %793 = vmatprep.subr.mxu0 0.0
    %794 = vmatpush1.msra.mxu0 %v756
    %795 = vmatprep.subr.mxu0 0.0
    %796 = vmatpush1.msra.mxu0 %v757
    %797 = vmatprep.subr.mxu0 0.0
    %798 = vmatpush1.msra.mxu0 0.0
    %799 = vmatprep.subr.mxu0 0.0
    %800 = vmatpush1.msra.mxu0 0.0
    %801 = vmatprep.subr.mxu0 0.0
    %802 = vmatpush1.msra.mxu0 0.0
    %803 = vmatprep.subr.mxu0 0.0
    %804 = vmatpush1.msra.mxu0 0.0
    %805 = vmatprep.subr.mxu0 0.0
    %806 = vmatpush1.msra.mxu0 0.0
    %807 = vmatprep.subr.mxu0 0.0
    %808 = vmatpush1.msra.mxu0 0.0
    %809 = vmatprep.subr.mxu0 0.0
    %810 = vmatpush1.msra.mxu0 0.0
    %811 = vmatprep.subr.mxu0 0.0
    %812 = vmatpush1.msra.mxu0 0.0
    %813 = vmatprep.subr.mxu0 0.0
    %814 = vmatpush1.msra.mxu0 0.0
    %815 = vmatprep.subr.mxu0 0.0
    %816 = vmatpush1.msra.mxu0 0.0
    %817 = vmatprep.subr.mxu0 0.0
    %818 = vmatpush1.msra.mxu0 0.0
    %819 = vmatprep.subr.mxu0 0.0
    %820 = vmatpush1.msra.mxu0 0.0
    %821 = vmatprep.subr.mxu0 0.0
    %822 = vmatpush1.msra.mxu0 0.0
    %823 = vmatprep.subr.mxu0 0.0
    %824 = vmatpush1.msra.mxu0 0.0
    %825 = vmatprep.subr.mxu0 0.0
    %826 = vmatpush1.msra.mxu0 0.0
    %827 = vmatprep.subr.mxu0 0.0
    %828 = vmatpush1.msra.mxu0 0.0
    %829 = vmatprep.mubr.f32.mxu0 0.0
    %830 = vmatmul.mubr.f32.gmra.mrb[0].mxu0 %v741
    %v831 = vpop.f32.mrb[0].mxu0
    %v832 = vadd.f32 %v763, %v831
    %v833 = vpop.f32.mrb[0].mxu0
    %834 = vdwg.mxu0
    %v835 = vmax.f32 %v832, 0.0
    %v836 = vld [vmem:[#allocation11] sm:$0xff]
    %v837 = vld [vmem:[#allocation11 + $0x8] sm:$0xff]
    %v838 = vld [vmem:[#allocation11 + $0x10] sm:$0xff]
    %v839 = vld [vmem:[#allocation11 + $0x18] sm:$0xff]
    %v840 = vld [vmem:[#allocation11 + $0x20] sm:$0xff]
    %v841 = vld [vmem:[#allocation11 + $0x28] sm:$0xff]
    %v842 = vld [vmem:[#allocation11 + $0x30] sm:$0xff]
    %v843 = vld [vmem:[#allocation11 + $0x38] sm:$0xff]
    %v844 = vld [vmem:[#allocation11 + $0x40] sm:$0xff]
    %v845 = vld [vmem:[#allocation11 + $0x48] sm:$0xff]
    %v846 = vld [vmem:[#allocation11 + $0x50] sm:$0xff]
    %v847 = vld [vmem:[#allocation11 + $0x58] sm:$0xff]
    %v848 = vld [vmem:[#allocation11 + $0x60] sm:$0xff]
    %v849 = vld [vmem:[#allocation11 + $0x68] sm:$0xff]
    %v850 = vld [vmem:[#allocation11 + $0x70] sm:$0xff]
    %v851 = vld [vmem:[#allocation11 + $0x78] sm:$0xff]
    %v852 = vld [vmem:[#allocation11 + $0x80] sm:$0xff]
    %v853 = vld [vmem:[#allocation11 + $0x88] sm:$0xff]
    %v854 = vld [vmem:[#allocation11 + $0x90] sm:$0xff]
    %v855 = vld [vmem:[#allocation11 + $0x98] sm:$0xff]
    %v856 = vld [vmem:[#allocation11 + $0xa0] sm:$0xff]
    %v857 = vld [vmem:[#allocation11 + $0xa8] sm:$0xff]
    %v858 = vld [vmem:[#allocation11 + $0xb0] sm:$0xff]
    %v859 = vld [vmem:[#allocation11 + $0xb8] sm:$0xff]
    %v860 = vld [vmem:[#allocation11 + $0xc0] sm:$0xff]
    %v861 = vld [vmem:[#allocation11 + $0xc8] sm:$0xff]
    %v862 = vld [vmem:[#allocation11 + $0xd0] sm:$0xff]
    %v863 = vld [vmem:[#allocation11 + $0xd8] sm:$0xff]
    %v864 = vld [vmem:[#allocation11 + $0xe0] sm:$0xff]
    %v865 = vld [vmem:[#allocation11 + $0xe8] sm:$0xff]
    %v866 = vld [vmem:[#allocation11 + $0xf0] sm:$0xff]
    %v867 = vld [vmem:[#allocation11 + $0xf8] sm:$0xff]
    %v868 = vld [vmem:[#allocation11 + $0x100] sm:$0xff]
    %v869 = vld [vmem:[#allocation11 + $0x108] sm:$0xff]
    %v870 = vld [vmem:[#allocation11 + $0x110] sm:$0xff]
    %v871 = vld [vmem:[#allocation11 + $0x118] sm:$0xff]
    %v872 = vld [vmem:[#allocation11 + $0x120] sm:$0xff]
    %v873 = vld [vmem:[#allocation11 + $0x128] sm:$0xff]
    %v874 = vld [vmem:[#allocation11 + $0x130] sm:$0xff]
    %v875 = vld [vmem:[#allocation11 + $0x138] sm:$0xff]
    %v876 = vld [vmem:[#allocation11 + $0x140] sm:$0xff]
    %v877 = vld [vmem:[#allocation11 + $0x148] sm:$0xff]
    %v878 = vld [vmem:[#allocation11 + $0x150] sm:$0xff]
    %v879 = vld [vmem:[#allocation11 + $0x158] sm:$0xff]
    %v880 = vld [vmem:[#allocation11 + $0x160] sm:$0xff]
    %v881 = vld [vmem:[#allocation11 + $0x168] sm:$0xff]
    %v882 = vld [vmem:[#allocation11 + $0x170] sm:$0xff]
    %v883 = vld [vmem:[#allocation11 + $0x178] sm:$0xff]
    %v884 = vld [vmem:[#allocation11 + $0x180] sm:$0xff]
    %v885 = vld [vmem:[#allocation11 + $0x188] sm:$0xff]
    %v886 = vld [vmem:[#allocation11 + $0x190] sm:$0xff]
    %v887 = vld [vmem:[#allocation11 + $0x198] sm:$0xff]
    %v888 = vld [vmem:[#allocation11 + $0x1a0] sm:$0xff]
    %v889 = vld [vmem:[#allocation11 + $0x1a8] sm:$0xff]
    %v890 = vld [vmem:[#allocation11 + $0x1b0] sm:$0xff]
    %v891 = vld [vmem:[#allocation11 + $0x1b8] sm:$0xff]
    %v892 = vld [vmem:[#allocation11 + $0x1c0] sm:$0xff]
    %v893 = vld [vmem:[#allocation11 + $0x1c8] sm:$0xff]
    %v894 = vld [vmem:[#allocation11 + $0x1d0] sm:$0xff]
    %v895 = vld [vmem:[#allocation11 + $0x1d8] sm:$0xff]
    %v896 = vld [vmem:[#allocation11 + $0x1e0] sm:$0xff]
    %v897 = vld [vmem:[#allocation11 + $0x1e8] sm:$0xff]
    %v898 = vld [vmem:[#allocation11 + $0x1f0] sm:$0xff]
    %v899 = vld [vmem:[#allocation11 + $0x1f8] sm:$0xff]
    %v900 = vld [vmem:[%s10] sm:$0xf]
    %v902 = vlaneseq
    %v903 = vshrl.u32 %v902, 7
    %v904 = vsub.s32 0, %v903
    %v905 = vrot.slane %v900, %v904
    %v906 = vlaneseq
    %v907 = vshrl.u32 %v906, 7
    %v908 = vsub.s32 1, %v907
    %v909 = vrot.slane %v900, %v908
    %v910 = vlaneseq
    %v911 = vshrl.u32 %v910, 7
    %v912 = vsub.s32 2, %v911
    %v913 = vrot.slane %v900, %v912
    %v914 = vlaneseq
    %v915 = vshrl.u32 %v914, 7
    %v916 = vsub.s32 3, %v915
    %v917 = vrot.slane %v900, %v916
    %922 = vmatprep.subr.mxu0 %v837
    %923 = vmatpush1.msra.mxu0 %v836
    %924 = vmatprep.subr.mxu0 %v841
    %925 = vmatpush1.msra.mxu0 %v840
    %926 = vmatprep.subr.mxu0 %v845
    %927 = vmatpush1.msra.mxu0 %v844
    %928 = vmatprep.subr.mxu0 %v849
    %929 = vmatpush1.msra.mxu0 %v848
    %930 = vmatprep.subr.mxu0 %v853
    %931 = vmatpush1.msra.mxu0 %v852
    %932 = vmatprep.subr.mxu0 %v857
    %933 = vmatpush1.msra.mxu0 %v856
    %934 = vmatprep.subr.mxu0 %v861
    %935 = vmatpush1.msra.mxu0 %v860
    %936 = vmatprep.subr.mxu0 %v865
    %937 = vmatpush1.msra.mxu0 %v864
    %938 = vmatprep.subr.mxu0 %v869
    %939 = vmatpush1.msra.mxu0 %v868
    %940 = vmatprep.subr.mxu0 %v873
    %941 = vmatpush1.msra.mxu0 %v872
    %942 = vmatprep.subr.mxu0 %v877
    %943 = vmatpush1.msra.mxu0 %v876
    %944 = vmatprep.subr.mxu0 %v881
    %945 = vmatpush1.msra.mxu0 %v880
    %946 = vmatprep.subr.mxu0 %v885
    %947 = vmatpush1.msra.mxu0 %v884
    %948 = vmatprep.subr.mxu0 %v889
    %949 = vmatpush1.msra.mxu0 %v888
    %950 = vmatprep.subr.mxu0 %v893
    %951 = vmatpush1.msra.mxu0 %v892
    %952 = vmatprep.subr.mxu0 %v897
    %953 = vmatpush1.msra.mxu0 %v896
    %954 = vmatprep.subr.mxu0 0.0
    %955 = vmatpush1.msra.mxu0 0.0
    %956 = vmatprep.subr.mxu0 0.0
    %957 = vmatpush1.msra.mxu0 0.0
    %958 = vmatprep.subr.mxu0 0.0
    %959 = vmatpush1.msra.mxu0 0.0
    %960 = vmatprep.subr.mxu0 0.0
    %961 = vmatpush1.msra.mxu0 0.0
    %962 = vmatprep.subr.mxu0 0.0
    %963 = vmatpush1.msra.mxu0 0.0
    %964 = vmatprep.subr.mxu0 0.0
    %965 = vmatpush1.msra.mxu0 0.0
    %966 = vmatprep.subr.mxu0 0.0
    %967 = vmatpush1.msra.mxu0 0.0
    %968 = vmatprep.subr.mxu0 0.0
    %969 = vmatpush1.msra.mxu0 0.0
    %970 = vmatprep.subr.mxu0 0.0
    %971 = vmatpush1.msra.mxu0 0.0
    %972 = vmatprep.subr.mxu0 0.0
    %973 = vmatpush1.msra.mxu0 0.0
    %974 = vmatprep.subr.mxu0 0.0
    %975 = vmatpush1.msra.mxu0 0.0
    %976 = vmatprep.subr.mxu0 0.0
    %977 = vmatpush1.msra.mxu0 0.0
    %978 = vmatprep.subr.mxu0 0.0
    %979 = vmatpush1.msra.mxu0 0.0
    %980 = vmatprep.subr.mxu0 0.0
    %981 = vmatpush1.msra.mxu0 0.0
    %982 = vmatprep.subr.mxu0 0.0
    %983 = vmatpush1.msra.mxu0 0.0
    %984 = vmatprep.subr.mxu0 0.0
    %985 = vmatpush1.msra.mxu0 0.0
    %986 = vmatprep.mubr.f32.mxu0 0.0
    %987 = vmatmul.mubr.f32.gmra.mrb[0].mxu0 %v835
    %v988 = vpop.f32.mrb[0].mxu0
    %v989 = vadd.f32 %v905, %v988
    %v990 = vpop.f32.mrb[0].mxu0
    %v991 = vadd.f32 %v909, %v990
    %992 = vdwg.mxu0
    %993 = vmatprep.subr.mxu0 %v839
    %994 = vmatpush1.msra.mxu0 %v838
    %995 = vmatprep.subr.mxu0 %v843
    %996 = vmatpush1.msra.mxu0 %v842
    %997 = vmatprep.subr.mxu0 %v847
    %998 = vmatpush1.msra.mxu0 %v846
    %999 = vmatprep.subr.mxu0 %v851
    %1000 = vmatpush1.msra.mxu0 %v850
    %1001 = vmatprep.subr.mxu0 %v855
    %1002 = vmatpush1.msra.mxu0 %v854
    %1003 = vmatprep.subr.mxu0 %v859
    %1004 = vmatpush1.msra.mxu0 %v858
    %1005 = vmatprep.subr.mxu0 %v863
    %1006 = vmatpush1.msra.mxu0 %v862
    %1007 = vmatprep.subr.mxu0 %v867
    %1008 = vmatpush1.msra.mxu0 %v866
    %1009 = vmatprep.subr.mxu0 %v871
    %1010 = vmatpush1.msra.mxu0 %v870
    %1011 = vmatprep.subr.mxu0 %v875
    %1012 = vmatpush1.msra.mxu0 %v874
    %1013 = vmatprep.subr.mxu0 %v879
    %1014 = vmatpush1.msra.mxu0 %v878
    %1015 = vmatprep.subr.mxu0 %v883
    %1016 = vmatpush1.msra.mxu0 %v882
    %1017 = vmatprep.subr.mxu0 %v887
    %1018 = vmatpush1.msra.mxu0 %v886
    %1019 = vmatprep.subr.mxu0 %v891
    %1020 = vmatpush1.msra.mxu0 %v890
    %1021 = vmatprep.subr.mxu0 %v895
    %1022 = vmatpush1.msra.mxu0 %v894
    %1023 = vmatprep.subr.mxu0 %v899
    %1024 = vmatpush1.msra.mxu0 %v898
    %1025 = vmatprep.subr.mxu0 0.0
    %1026 = vmatpush1.msra.mxu0 0.0
    %1027 = vmatprep.subr.mxu0 0.0
    %1028 = vmatpush1.msra.mxu0 0.0
    %1029 = vmatprep.subr.mxu0 0.0
    %1030 = vmatpush1.msra.mxu0 0.0
    %1031 = vmatprep.subr.mxu0 0.0
    %1032 = vmatpush1.msra.mxu0 0.0
    %1033 = vmatprep.subr.mxu0 0.0
    %1034 = vmatpush1.msra.mxu0 0.0
    %1035 = vmatprep.subr.mxu0 0.0
    %1036 = vmatpush1.msra.mxu0 0.0
    %1037 = vmatprep.subr.mxu0 0.0
    %1038 = vmatpush1.msra.mxu0 0.0
    %1039 = vmatprep.subr.mxu0 0.0
    %1040 = vmatpush1.msra.mxu0 0.0
    %1041 = vmatprep.subr.mxu0 0.0
    %1042 = vmatpush1.msra.mxu0 0.0
    %1043 = vmatprep.subr.mxu0 0.0
    %1044 = vmatpush1.msra.mxu0 0.0
    %1045 = vmatprep.subr.mxu0 0.0
    %1046 = vmatpush1.msra.mxu0 0.0
    %1047 = vmatprep.subr.mxu0 0.0
    %1048 = vmatpush1.msra.mxu0 0.0
    %1049 = vmatprep.subr.mxu0 0.0
    %1050 = vmatpush1.msra.mxu0 0.0
    %1051 = vmatprep.subr.mxu0 0.0
    %1052 = vmatpush1.msra.mxu0 0.0
    %1053 = vmatprep.subr.mxu0 0.0
    %1054 = vmatpush1.msra.mxu0 0.0
    %1055 = vmatprep.subr.mxu0 0.0
    %1056 = vmatpush1.msra.mxu0 0.0
    %1057 = vmatprep.mubr.f32.mxu0 0.0
    %1058 = vmatmul.mubr.f32.gmra.mrb[0].mxu0 %v835
    %v1059 = vpop.f32.mrb[0].mxu0
    %v1060 = vadd.f32 %v913, %v1059
    %v1061 = vpop.f32.mrb[0].mxu0
    %v1062 = vadd.f32 %v917, %v1061
    %1063 = vdwg.mxu0
    %v1064 = vmax.f32 %v989, 0.0
    %v1065 = vmax.f32 %v991, 0.0
    %v1066 = vmax.f32 %v1060, 0.0
    %v1067 = vmax.f32 %v1062, 0.0
    %v1068 = vld [vmem:[#allocation13] sm:$0xff]
    %v1069 = vld [vmem:[#allocation13 + $0x8] sm:$0xff]
    %v1070 = vld [vmem:[#allocation13 + $0x10] sm:$0xff]
    %v1071 = vld [vmem:[#allocation13 + $0x18] sm:$0xff]
    %v1072 = vld [vmem:[#allocation13 + $0x20] sm:$0xff]
    %v1073 = vld [vmem:[#allocation13 + $0x28] sm:$0xff]
    %v1074 = vld [vmem:[#allocation13 + $0x30] sm:$0xff]
    %v1075 = vld [vmem:[#allocation13 + $0x38] sm:$0xff]
    %v1076 = vld [vmem:[#allocation13 + $0x40] sm:$0xff]
    %v1077 = vld [vmem:[#allocation13 + $0x48] sm:$0xff]
    %v1078 = vld [vmem:[#allocation13 + $0x50] sm:$0xff]
    %v1079 = vld [vmem:[#allocation13 + $0x58] sm:$0xff]
    %v1080 = vld [vmem:[#allocation13 + $0x60] sm:$0xff]
    %v1081 = vld [vmem:[#allocation13 + $0x68] sm:$0xff]
    %v1082 = vld [vmem:[#allocation13 + $0x70] sm:$0xff]
    %v1083 = vld [vmem:[#allocation13 + $0x78] sm:$0xff]
    %v1084 = vld [vmem:[#allocation13 + $0x80] sm:$0xff]
    %v1085 = vld [vmem:[#allocation13 + $0x88] sm:$0xff]
    %v1086 = vld [vmem:[#allocation13 + $0x90] sm:$0xff]
    %v1087 = vld [vmem:[#allocation13 + $0x98] sm:$0xff]
    %v1088 = vld [vmem:[#allocation13 + $0xa0] sm:$0xff]
    %v1089 = vld [vmem:[#allocation13 + $0xa8] sm:$0xff]
    %v1090 = vld [vmem:[#allocation13 + $0xb0] sm:$0xff]
    %v1091 = vld [vmem:[#allocation13 + $0xb8] sm:$0xff]
    %v1092 = vld [vmem:[#allocation13 + $0xc0] sm:$0xff]
    %v1093 = vld [vmem:[#allocation13 + $0xc8] sm:$0xff]
    %v1094 = vld [vmem:[#allocation13 + $0xd0] sm:$0xff]
    %v1095 = vld [vmem:[#allocation13 + $0xd8] sm:$0xff]
    %v1096 = vld [vmem:[#allocation13 + $0xe0] sm:$0xff]
    %v1097 = vld [vmem:[#allocation13 + $0xe8] sm:$0xff]
    %v1098 = vld [vmem:[#allocation13 + $0xf0] sm:$0xff]
    %v1099 = vld [vmem:[#allocation13 + $0xf8] sm:$0xff]
    %v1100 = vld [vmem:[#allocation13 + $0x100] sm:$0xff]
    %v1101 = vld [vmem:[#allocation13 + $0x108] sm:$0xff]
    %v1102 = vld [vmem:[#allocation13 + $0x110] sm:$0xff]
    %v1103 = vld [vmem:[#allocation13 + $0x118] sm:$0xff]
    %v1104 = vld [vmem:[#allocation13 + $0x120] sm:$0xff]
    %v1105 = vld [vmem:[#allocation13 + $0x128] sm:$0xff]
    %v1106 = vld [vmem:[#allocation13 + $0x130] sm:$0xff]
    %v1107 = vld [vmem:[#allocation13 + $0x138] sm:$0xff]
    %v1108 = vld [vmem:[#allocation13 + $0x140] sm:$0xff]
    %v1109 = vld [vmem:[#allocation13 + $0x148] sm:$0xff]
    %v1110 = vld [vmem:[#allocation13 + $0x150] sm:$0xff]
    %v1111 = vld [vmem:[#allocation13 + $0x158] sm:$0xff]
    %v1112 = vld [vmem:[#allocation13 + $0x160] sm:$0xff]
    %v1113 = vld [vmem:[#allocation13 + $0x168] sm:$0xff]
    %v1114 = vld [vmem:[#allocation13 + $0x170] sm:$0xff]
    %v1115 = vld [vmem:[#allocation13 + $0x178] sm:$0xff]
    %v1116 = vld [vmem:[#allocation13 + $0x180] sm:$0xff]
    %v1117 = vld [vmem:[#allocation13 + $0x188] sm:$0xff]
    %v1118 = vld [vmem:[#allocation13 + $0x190] sm:$0xff]
    %v1119 = vld [vmem:[#allocation13 + $0x198] sm:$0xff]
    %v1120 = vld [vmem:[#allocation13 + $0x1a0] sm:$0xff]
    %v1121 = vld [vmem:[#allocation13 + $0x1a8] sm:$0xff]
    %v1122 = vld [vmem:[#allocation13 + $0x1b0] sm:$0xff]
    %v1123 = vld [vmem:[#allocation13 + $0x1b8] sm:$0xff]
    %v1124 = vld [vmem:[#allocation13 + $0x1c0] sm:$0xff]
    %v1125 = vld [vmem:[#allocation13 + $0x1c8] sm:$0xff]
    %v1126 = vld [vmem:[#allocation13 + $0x1d0] sm:$0xff]
    %v1127 = vld [vmem:[#allocation13 + $0x1d8] sm:$0xff]
    %v1128 = vld [vmem:[#allocation13 + $0x1e0] sm:$0xff]
    %v1129 = vld [vmem:[#allocation13 + $0x1e8] sm:$0xff]
    %v1130 = vld [vmem:[#allocation13 + $0x1f0] sm:$0xff]
    %v1131 = vld [vmem:[#allocation13 + $0x1f8] sm:$0xff]
    %v1132 = vld [vmem:[#allocation13 + $0x200] sm:$0xff]
    %v1133 = vld [vmem:[#allocation13 + $0x208] sm:$0xff]
    %v1134 = vld [vmem:[#allocation13 + $0x210] sm:$0xff]
    %v1135 = vld [vmem:[#allocation13 + $0x218] sm:$0xff]
    %v1136 = vld [vmem:[#allocation13 + $0x220] sm:$0xff]
    %v1137 = vld [vmem:[#allocation13 + $0x228] sm:$0xff]
    %v1138 = vld [vmem:[#allocation13 + $0x230] sm:$0xff]
    %v1139 = vld [vmem:[#allocation13 + $0x238] sm:$0xff]
    %v1140 = vld [vmem:[#allocation13 + $0x240] sm:$0xff]
    %v1141 = vld [vmem:[#allocation13 + $0x248] sm:$0xff]
    %v1142 = vld [vmem:[#allocation13 + $0x250] sm:$0xff]
    %v1143 = vld [vmem:[#allocation13 + $0x258] sm:$0xff]
    %v1144 = vld [vmem:[#allocation13 + $0x260] sm:$0xff]
    %v1145 = vld [vmem:[#allocation13 + $0x268] sm:$0xff]
    %v1146 = vld [vmem:[#allocation13 + $0x270] sm:$0xff]
    %v1147 = vld [vmem:[#allocation13 + $0x278] sm:$0xff]
    %v1148 = vld [vmem:[#allocation13 + $0x280] sm:$0xff]
    %v1149 = vld [vmem:[#allocation13 + $0x288] sm:$0xff]
    %v1150 = vld [vmem:[#allocation13 + $0x290] sm:$0xff]
    %v1151 = vld [vmem:[#allocation13 + $0x298] sm:$0xff]
    %v1152 = vld [vmem:[#allocation13 + $0x2a0] sm:$0xff]
    %v1153 = vld [vmem:[#allocation13 + $0x2a8] sm:$0xff]
    %v1154 = vld [vmem:[#allocation13 + $0x2b0] sm:$0xff]
    %v1155 = vld [vmem:[#allocation13 + $0x2b8] sm:$0xff]
    %v1156 = vld [vmem:[#allocation13 + $0x2c0] sm:$0xff]
    %v1157 = vld [vmem:[#allocation13 + $0x2c8] sm:$0xff]
    %v1158 = vld [vmem:[#allocation13 + $0x2d0] sm:$0xff]
    %v1159 = vld [vmem:[#allocation13 + $0x2d8] sm:$0xff]
    %v1160 = vld [vmem:[#allocation13 + $0x2e0] sm:$0xff]
    %v1161 = vld [vmem:[#allocation13 + $0x2e8] sm:$0xff]
    %v1162 = vld [vmem:[#allocation13 + $0x2f0] sm:$0xff]
    %v1163 = vld [vmem:[#allocation13 + $0x2f8] sm:$0xff]
    %v1164 = vld [vmem:[#allocation13 + $0x300] sm:$0xff]
    %v1165 = vld [vmem:[#allocation13 + $0x308] sm:$0xff]
    %v1166 = vld [vmem:[#allocation13 + $0x310] sm:$0xff]
    %v1167 = vld [vmem:[#allocation13 + $0x318] sm:$0xff]
    %v1168 = vld [vmem:[#allocation13 + $0x320] sm:$0xff]
    %v1169 = vld [vmem:[#allocation13 + $0x328] sm:$0xff]
    %v1170 = vld [vmem:[#allocation13 + $0x330] sm:$0xff]
    %v1171 = vld [vmem:[#allocation13 + $0x338] sm:$0xff]
    %v1172 = vld [vmem:[#allocation13 + $0x340] sm:$0xff]
    %v1173 = vld [vmem:[#allocation13 + $0x348] sm:$0xff]
    %v1174 = vld [vmem:[#allocation13 + $0x350] sm:$0xff]
    %v1175 = vld [vmem:[#allocation13 + $0x358] sm:$0xff]
    %v1176 = vld [vmem:[#allocation13 + $0x360] sm:$0xff]
    %v1177 = vld [vmem:[#allocation13 + $0x368] sm:$0xff]
    %v1178 = vld [vmem:[#allocation13 + $0x370] sm:$0xff]
    %v1179 = vld [vmem:[#allocation13 + $0x378] sm:$0xff]
    %v1180 = vld [vmem:[#allocation13 + $0x380] sm:$0xff]
    %v1181 = vld [vmem:[#allocation13 + $0x388] sm:$0xff]
    %v1182 = vld [vmem:[#allocation13 + $0x390] sm:$0xff]
    %v1183 = vld [vmem:[#allocation13 + $0x398] sm:$0xff]
    %v1184 = vld [vmem:[#allocation13 + $0x3a0] sm:$0xff]
    %v1185 = vld [vmem:[#allocation13 + $0x3a8] sm:$0xff]
    %v1186 = vld [vmem:[#allocation13 + $0x3b0] sm:$0xff]
    %v1187 = vld [vmem:[#allocation13 + $0x3b8] sm:$0xff]
    %v1188 = vld [vmem:[#allocation13 + $0x3c0] sm:$0xff]
    %v1189 = vld [vmem:[#allocation13 + $0x3c8] sm:$0xff]
    %v1190 = vld [vmem:[#allocation13 + $0x3d0] sm:$0xff]
    %v1191 = vld [vmem:[#allocation13 + $0x3d8] sm:$0xff]
    %v1192 = vld [vmem:[#allocation13 + $0x3e0] sm:$0xff]
    %v1193 = vld [vmem:[#allocation13 + $0x3e8] sm:$0xff]
    %v1194 = vld [vmem:[#allocation13 + $0x3f0] sm:$0xff]
    %v1195 = vld [vmem:[#allocation13 + $0x3f8] sm:$0xff]
    %v1196 = vld [vmem:[%s12] sm:$0x3]
    %v1198 = vlaneseq
    %v1199 = vshrl.u32 %v1198, 7
    %v1200 = vsub.s32 0, %v1199
    %v1201 = vrot.slane %v1196, %v1200
    %v1202 = vlaneseq
    %v1203 = vshrl.u32 %v1202, 7
    %v1204 = vsub.s32 1, %v1203
    %v1205 = vrot.slane %v1196, %v1204
    %1208 = vmatprep.subr.mxu0 %v1069
    %1209 = vmatpush1.msra.mxu0 %v1068
    %1210 = vmatprep.subr.mxu0 %v1071
    %1211 = vmatpush1.msra.mxu0 %v1070
    %1212 = vmatprep.subr.mxu0 %v1073
    %1213 = vmatpush1.msra.mxu0 %v1072
    %1214 = vmatprep.subr.mxu0 %v1075
    %1215 = vmatpush1.msra.mxu0 %v1074
    %1216 = vmatprep.subr.mxu0 %v1077
    %1217 = vmatpush1.msra.mxu0 %v1076
    %1218 = vmatprep.subr.mxu0 %v1079
    %1219 = vmatpush1.msra.mxu0 %v1078
    %1220 = vmatprep.subr.mxu0 %v1081
    %1221 = vmatpush1.msra.mxu0 %v1080
    %1222 = vmatprep.subr.mxu0 %v1083
    %1223 = vmatpush1.msra.mxu0 %v1082
    %1224 = vmatprep.subr.mxu0 %v1085
    %1225 = vmatpush1.msra.mxu0 %v1084
    %1226 = vmatprep.subr.mxu0 %v1087
    %1227 = vmatpush1.msra.mxu0 %v1086
    %1228 = vmatprep.subr.mxu0 %v1089
    %1229 = vmatpush1.msra.mxu0 %v1088
    %1230 = vmatprep.subr.mxu0 %v1091
    %1231 = vmatpush1.msra.mxu0 %v1090
    %1232 = vmatprep.subr.mxu0 %v1093
    %1233 = vmatpush1.msra.mxu0 %v1092
    %1234 = vmatprep.subr.mxu0 %v1095
    %1235 = vmatpush1.msra.mxu0 %v1094
    %1236 = vmatprep.subr.mxu0 %v1097
    %1237 = vmatpush1.msra.mxu0 %v1096
    %1238 = vmatprep.subr.mxu0 %v1099
    %1239 = vmatpush1.msra.mxu0 %v1098
    %1240 = vmatprep.subr.mxu0 %v1101
    %1241 = vmatpush1.msra.mxu0 %v1100
    %1242 = vmatprep.subr.mxu0 %v1103
    %1243 = vmatpush1.msra.mxu0 %v1102
    %1244 = vmatprep.subr.mxu0 %v1105
    %1245 = vmatpush1.msra.mxu0 %v1104
    %1246 = vmatprep.subr.mxu0 %v1107
    %1247 = vmatpush1.msra.mxu0 %v1106
    %1248 = vmatprep.subr.mxu0 %v1109
    %1249 = vmatpush1.msra.mxu0 %v1108
    %1250 = vmatprep.subr.mxu0 %v1111
    %1251 = vmatpush1.msra.mxu0 %v1110
    %1252 = vmatprep.subr.mxu0 %v1113
    %1253 = vmatpush1.msra.mxu0 %v1112
    %1254 = vmatprep.subr.mxu0 %v1115
    %1255 = vmatpush1.msra.mxu0 %v1114
    %1256 = vmatprep.subr.mxu0 %v1117
    %1257 = vmatpush1.msra.mxu0 %v1116
    %1258 = vmatprep.subr.mxu0 %v1119
    %1259 = vmatpush1.msra.mxu0 %v1118
    %1260 = vmatprep.subr.mxu0 %v1121
    %1261 = vmatpush1.msra.mxu0 %v1120
    %1262 = vmatprep.subr.mxu0 %v1123
    %1263 = vmatpush1.msra.mxu0 %v1122
    %1264 = vmatprep.subr.mxu0 %v1125
    %1265 = vmatpush1.msra.mxu0 %v1124
    %1266 = vmatprep.subr.mxu0 %v1127
    %1267 = vmatpush1.msra.mxu0 %v1126
    %1268 = vmatprep.subr.mxu0 %v1129
    %1269 = vmatpush1.msra.mxu0 %v1128
    %1270 = vmatprep.subr.mxu0 %v1131
    %1271 = vmatpush1.msra.mxu0 %v1130
    %1272 = vmatprep.mubr.f32.mxu0 %v1065
    %1273 = vmatmul.mubr.f32.gmra.mrb[0].mxu0 %v1064
    %v1274 = vpop.f32.mrb[0].mxu0
    %v1275 = vadd.f32 %v1201, %v1274
    %v1276 = vpop.f32.mrb[0].mxu0
    %v1277 = vadd.f32 %v1205, %v1276
    %1278 = vdwg.mxu0
    %1279 = vmatprep.subr.mxu0 %v1133
    %1280 = vmatpush1.msra.mxu0 %v1132
    %1281 = vmatprep.subr.mxu0 %v1135
    %1282 = vmatpush1.msra.mxu0 %v1134
    %1283 = vmatprep.subr.mxu0 %v1137
    %1284 = vmatpush1.msra.mxu0 %v1136
    %1285 = vmatprep.subr.mxu0 %v1139
    %1286 = vmatpush1.msra.mxu0 %v1138
    %1287 = vmatprep.subr.mxu0 %v1141
    %1288 = vmatpush1.msra.mxu0 %v1140
    %1289 = vmatprep.subr.mxu0 %v1143
    %1290 = vmatpush1.msra.mxu0 %v1142
    %1291 = vmatprep.subr.mxu0 %v1145
    %1292 = vmatpush1.msra.mxu0 %v1144
    %1293 = vmatprep.subr.mxu0 %v1147
    %1294 = vmatpush1.msra.mxu0 %v1146
    %1295 = vmatprep.subr.mxu0 %v1149
    %1296 = vmatpush1.msra.mxu0 %v1148
    %1297 = vmatprep.subr.mxu0 %v1151
    %1298 = vmatpush1.msra.mxu0 %v1150
    %1299 = vmatprep.subr.mxu0 %v1153
    %1300 = vmatpush1.msra.mxu0 %v1152
    %1301 = vmatprep.subr.mxu0 %v1155
    %1302 = vmatpush1.msra.mxu0 %v1154
    %1303 = vmatprep.subr.mxu0 %v1157
    %1304 = vmatpush1.msra.mxu0 %v1156
    %1305 = vmatprep.subr.mxu0 %v1159
    %1306 = vmatpush1.msra.mxu0 %v1158
    %1307 = vmatprep.subr.mxu0 %v1161
    %1308 = vmatpush1.msra.mxu0 %v1160
    %1309 = vmatprep.subr.mxu0 %v1163
    %1310 = vmatpush1.msra.mxu0 %v1162
    %1311 = vmatprep.subr.mxu0 %v1165
    %1312 = vmatpush1.msra.mxu0 %v1164
    %1313 = vmatprep.subr.mxu0 %v1167
    %1314 = vmatpush1.msra.mxu0 %v1166
    %1315 = vmatprep.subr.mxu0 %v1169
    %1316 = vmatpush1.msra.mxu0 %v1168
    %1317 = vmatprep.subr.mxu0 %v1171
    %1318 = vmatpush1.msra.mxu0 %v1170
    %1319 = vmatprep.subr.mxu0 %v1173
    %1320 = vmatpush1.msra.mxu0 %v1172
    %1321 = vmatprep.subr.mxu0 %v1175
    %1322 = vmatpush1.msra.mxu0 %v1174
    %1323 = vmatprep.subr.mxu0 %v1177
    %1324 = vmatpush1.msra.mxu0 %v1176
    %1325 = vmatprep.subr.mxu0 %v1179
    %1326 = vmatpush1.msra.mxu0 %v1178
    %1327 = vmatprep.subr.mxu0 %v1181
    %1328 = vmatpush1.msra.mxu0 %v1180
    %1329 = vmatprep.subr.mxu0 %v1183
    %1330 = vmatpush1.msra.mxu0 %v1182
    %1331 = vmatprep.subr.mxu0 %v1185
    %1332 = vmatpush1.msra.mxu0 %v1184
    %1333 = vmatprep.subr.mxu0 %v1187
    %1334 = vmatpush1.msra.mxu0 %v1186
    %1335 = vmatprep.subr.mxu0 %v1189
    %1336 = vmatpush1.msra.mxu0 %v1188
    %1337 = vmatprep.subr.mxu0 %v1191
    %1338 = vmatpush1.msra.mxu0 %v1190
    %1339 = vmatprep.subr.mxu0 %v1193
    %1340 = vmatpush1.msra.mxu0 %v1192
    %1341 = vmatprep.subr.mxu0 %v1195
    %1342 = vmatpush1.msra.mxu0 %v1194
    %1343 = vmatprep.mubr.f32.mxu0 %v1067
    %1344 = vmatmul.mubr.f32.gmra.mrb[0].mxu0 %v1066
    %v1345 = vpop.f32.mrb[0].mxu0
    %v1346 = vadd.f32 %v1275, %v1345
    %v1347 = vpop.f32.mrb[0].mxu0
    %v1348 = vadd.f32 %v1277, %v1347
    %1349 = vdwg.mxu0
    %v1350 = vmax.f32 %v1346, 0.0
    %v1351 = vmax.f32 %v1348, 0.0
    %1352 = vst [vmem:[#allocation14] sm:$0xff] %v1350
    %1353 = vst [vmem:[#allocation14 + $0x8] sm:$0xff] %v1351
    // Predicated region
    $region82: #{tpu_custom_call.1} parent=1 // pred_check
      _
    $region83: #{tpu_custom_call.1} parent=1 // pred_check_branch
      %1355 = sbr.rel (0) target = $region85
    $region84: #{tpu_custom_call.1} parent=1 // pred_region
      %s1357 = ssub.s32 256, 256
      %1358 = vsyncadd [#allocation4], %s1357
      %s1360 = sshll.u32 [#allocation14], 4
      %s1361 = int_to_ptr.vmem [resolvable:$true] %s1360
      %1363 = dma.vmem_to_hbm [thread:$0]  %s1361, 256, %s13, [#allocation4]
    $region85: #{tpu_custom_call.1} parent=1 // pred_fallthru
      _
    // Predicated region
    $region86: #{tpu_custom_call.1} parent=1 // pred_check
      _
    $region87: #{tpu_custom_call.1} parent=1 // pred_check_branch
      %1365 = sbr.rel (0) target = $region89
    $region88: #{tpu_custom_call.1} parent=1 // pred_region
      %1366 = dma.done [#allocation4], 256
    $region89: #{tpu_custom_call.1} parent=1 // pred_fallthru
      _
    %1367 = vsyncpa [#allocation3], 1
    %1368 = vsyncpa [#allocation6], 1
    %1369 = vsyncpa [#allocation9], 1
    %1370 = vsyncpa [#allocation12], 1
    %1371 = vsyncpa [#allocation4], 1

</llo_original>
